<compile_context>
chip_gen: v7x
topology: tpu7x:2x2x1
jax: 0.10.0
libtpu: 0.0.40
codegen_flags: <defaults>
</compile_context>

<pallas_src>
import math

import jax
import jax.numpy as jnp
from jax.experimental import pallas as pl
from jax.experimental.pallas import tpu as pltpu

# ---- configuration (small, consistent with the module's structure) ----
B = 2                  # batch
T = 16                 # sequence length (== block_size here)
C = 128                # n_embed
N_HEAD = 4
HEAD_SIZE = C // N_HEAD
HID = C                # FeedForward hidden size (hiddenshape == n_embed)
BT = B * T
EPS = 1e-6


def block_kernel(x_ref,
                 g1_ref, b1_ref,
                 wqkv_ref,
                 wp_ref, bp_ref,
                 g2_ref, b2_ref,
                 w1_ref, bf1_ref, w2_ref, bf2_ref,
                 o_ref):
    """Single grid step: the whole (B*T, C) batch, entire block fused."""
    x = x_ref[...]                               # (BT, C) f32

    # ---------------- LayerNorm 1 (f32 math) ----------------
    mu = jnp.mean(x, axis=-1, keepdims=True)
    var = jnp.mean((x - mu) ** 2, axis=-1, keepdims=True)
    xln = (x - mu) * jax.lax.rsqrt(var + EPS) * g1_ref[0] + b1_ref[0]

    # ---------------- Fused Q/K/V projection (one 384-lane matmul) ----------
    xln_bf = xln.astype(jnp.bfloat16)
    qkv = jnp.dot(xln_bf, wqkv_ref[...].astype(jnp.bfloat16),
                  preferred_element_type=jnp.float32)        # (BT, 3C)
    qkv_bf = qkv.astype(jnp.bfloat16)
    q = qkv_bf[:, 0 * C:1 * C]                               # (BT, C) bf16
    k = qkv_bf[:, 1 * C:2 * C]
    v = qkv_bf[:, 2 * C:3 * C]

    # Causal additive bias (0 / -1e30), built once, reused by every head.
    rows = jax.lax.broadcasted_iota(jnp.int32, (T, T), 0)
    cols = jax.lax.broadcasted_iota(jnp.int32, (T, T), 1)
    mask_bias = jnp.where(rows >= cols, 0.0, -1e30).astype(jnp.float32)

    # NOTE: PyTorch reference scales by 1/sqrt(n_embed) (not head_size);
    # reproduced exactly here.
    scale = 1.0 / math.sqrt(C)

    wp_bf = wp_ref[...].astype(jnp.bfloat16)
    sa = jnp.zeros((BT, C), jnp.float32)
    for h in range(N_HEAD):                      # static unroll, N_HEAD small
        sl = slice(h * HEAD_SIZE, (h + 1) * HEAD_SIZE)
        qh = q[:, sl].reshape(B, T, HEAD_SIZE)
        kh = k[:, sl].reshape(B, T, HEAD_SIZE)
        vh = v[:, sl].reshape(B, T, HEAD_SIZE)

        # Scores batched over the batch dim; no explicit k-transpose.
        s = jnp.einsum('bqd,bkd->bqk', qh, kh,
                       preferred_element_type=jnp.float32) * scale
        s = s + mask_bias[None]
        s = s - jnp.max(s, axis=-1, keepdims=True)           # numerical safety
        p = jnp.exp(s)
        p = p * pl.reciprocal(jnp.sum(p, axis=-1, keepdims=True), approx=True)

        oh = jnp.einsum('bqk,bkd->bqd', p.astype(jnp.bfloat16), vh,
                        preferred_element_type=jnp.float32)  # (B, T, D)

        # Distributive output projection: head_out_h @ Wp[rows of head h]
        # -> full 128-lane (BT, C) partial result, no lane-axis concatenate.
        sa = sa + jnp.dot(oh.reshape(BT, HEAD_SIZE).astype(jnp.bfloat16),
                          wp_bf[sl, :],
                          preferred_element_type=jnp.float32)

    sa = sa + bp_ref[0]
    # TODO(synk): dropout(p=0.14) omitted (eval-mode identity).
    x1 = x + sa                                  # first residual (f32)

    # ---------------- LayerNorm 2 ----------------
    mu2 = jnp.mean(x1, axis=-1, keepdims=True)
    var2 = jnp.mean((x1 - mu2) ** 2, axis=-1, keepdims=True)
    x1ln = (x1 - mu2) * jax.lax.rsqrt(var2 + EPS) * g2_ref[0] + b2_ref[0]

    # ---------------- FeedForward: Linear -> ReLU -> Linear ----------------
    h1 = jnp.dot(x1ln.astype(jnp.bfloat16), w1_ref[...].astype(jnp.bfloat16),
                 preferred_element_type=jnp.float32) + bf1_ref[0]
    h1 = jnp.maximum(h1, 0.0)
    # TODO(synk): dropout(p=0.1) omitted (eval-mode identity).
    ff = jnp.dot(h1.astype(jnp.bfloat16), w2_ref[...].astype(jnp.bfloat16),
                 preferred_element_type=jnp.float32) + bf2_ref[0]

    o_ref[...] = x1 + ff                         # second residual


def transformer_block(x, params):
    """x: (B, T, C) f32. params: dict of weights (see init_params)."""
    x2 = x.reshape(BT, C)                        # free row-major reshape
    # Fuse the three projection weights once, outside the kernel.
    wqkv = jnp.concatenate([params["wq"], params["wk"], params["wv"]], axis=1)

    full = lambda shape: pl.BlockSpec(shape, lambda i: (0, 0))
    # NOTE: at the real n_embed=512 / T=384 config, mark the constant-weight
    # specs with pipeline_mode=pl.Buffered(1) and raise vmem_limit_bytes; at
    # this toy size default double-buffering costs <1 MiB so it is left as-is.
    in_specs = [
        full((BT, C)),                                     # x (flattened)
        full((1, C)), full((1, C)),                        # ln1 gamma/beta
        full((C, 3 * C)),                                  # Wqkv (fused)
        full((C, C)), full((1, C)),                        # Wproj, bproj
        full((1, C)), full((1, C)),                        # ln2 gamma/beta
        full((C, HID)), full((1, HID)),                    # W1, b1
        full((HID, C)), full((1, C)),                      # W2, b2
    ]
    out_spec = full((BT, C))

    fn = pl.pallas_call(
        block_kernel,
        out_shape=jax.ShapeDtypeStruct((BT, C), jnp.float32),
        grid_spec=pltpu.PrefetchScalarGridSpec(
            num_scalar_prefetch=0,
            grid=(1,),                                     # one fat step
            in_specs=in_specs,
            out_specs=out_spec,
        ),
        compiler_params=pltpu.CompilerParams(
            dimension_semantics=("arbitrary",)),
    )
    out2 = fn(
        x2,
        params["ln1_g"], params["ln1_b"],
        wqkv,
        params["wp"], params["bp"],
        params["ln2_g"], params["ln2_b"],
        params["w1"], params["bf1"], params["w2"], params["bf2"],
    )
    return out2.reshape(B, T, C)


def block_reference(x, params):
    """Pure-JAX f32 reference with the exact PyTorch semantics."""
    def ln(y, g, b):
        mu = jnp.mean(y, -1, keepdims=True)
        var = jnp.mean((y - mu) ** 2, -1, keepdims=True)
        return (y - mu) / jnp.sqrt(var + EPS) * g + b

    Bq, Tq, Cq = x.shape
    xln = ln(x, params["ln1_g"][0], params["ln1_b"][0])
    q = xln @ params["wq"]
    k = xln @ params["wk"]
    v = xln @ params["wv"]
    qh = q.reshape(Bq, Tq, N_HEAD, HEAD_SIZE)
    kh = k.reshape(Bq, Tq, N_HEAD, HEAD_SIZE)
    vh = v.reshape(Bq, Tq, N_HEAD, HEAD_SIZE)
    s = jnp.einsum('bqhd,bkhd->bhqk', qh, kh) / math.sqrt(Cq)
    mask = jnp.tril(jnp.ones((Tq, Tq), bool))
    s = jnp.where(mask[None, None], s, -jnp.inf)
    p = jax.nn.softmax(s, axis=-1)
    oh = jnp.einsum('bhqk,bkhd->bqhd', p, vh).reshape(Bq, Tq, Cq)
    sa = oh @ params["wp"] + params["bp"][0]
    x1 = x + sa
    x1ln = ln(x1, params["ln2_g"][0], params["ln2_b"][0])
    h1 = jnp.maximum(x1ln @ params["w1"] + params["bf1"][0], 0.0)
    ff = h1 @ params["w2"] + params["bf2"][0]
    return x1 + ff


def init_params(key):
    ks = jax.random.split(key, 8)
    s = 0.02
    return {
        "ln1_g": jnp.ones((1, C), jnp.float32),
        "ln1_b": jnp.zeros((1, C), jnp.float32),
        "wq": s * jax.random.normal(ks[0], (C, C), jnp.float32),
        "wk": s * jax.random.normal(ks[1], (C, C), jnp.float32),
        "wv": s * jax.random.normal(ks[2], (C, C), jnp.float32),
        "wp": s * jax.random.normal(ks[3], (C, C), jnp.float32),
        "bp": jnp.zeros((1, C), jnp.float32),
        "ln2_g": jnp.ones((1, C), jnp.float32),
        "ln2_b": jnp.zeros((1, C), jnp.float32),
        "w1": s * jax.random.normal(ks[4], (C, HID), jnp.float32),
        "bf1": jnp.zeros((1, HID), jnp.float32),
        "w2": s * jax.random.normal(ks[5], (HID, C), jnp.float32),
        "bf2": jnp.zeros((1, C), jnp.float32),
    }


if __name__ == "__main__":
    key = jax.random.PRNGKey(0)
    kx, kp = jax.random.split(key)
    x = jax.random.normal(kx, (B, T, C), jnp.float32)
    params = init_params(kp)

    out = transformer_block(x, params)
    out = jax.block_until_ready(out)
    assert out.shape == (B, T, C) and out.dtype == jnp.float32
    assert bool(jnp.all(jnp.isfinite(out)))

    ref = block_reference(x, params)
    # bf16 MXU path vs f32 reference: generous but meaningful tolerance.
    assert bool(jnp.allclose(out, ref, atol=2e-2, rtol=2e-2)), (
        float(jnp.max(jnp.abs(out - ref))))
    print("KERNEL_OK")
</pallas_src>

<mosaic_0001>
module attributes {stable_mosaic.version = 11 : i64} {
  func.func @block_kernel(%arg0: i32, %arg1: memref<32x128xf32, #tpu.memory_space<vmem>>, %arg2: memref<1x128xf32, #tpu.memory_space<vmem>>, %arg3: memref<1x128xf32, #tpu.memory_space<vmem>>, %arg4: memref<128x384xf32, #tpu.memory_space<vmem>>, %arg5: memref<128x128xf32, #tpu.memory_space<vmem>>, %arg6: memref<1x128xf32, #tpu.memory_space<vmem>>, %arg7: memref<1x128xf32, #tpu.memory_space<vmem>>, %arg8: memref<1x128xf32, #tpu.memory_space<vmem>>, %arg9: memref<128x128xf32, #tpu.memory_space<vmem>>, %arg10: memref<1x128xf32, #tpu.memory_space<vmem>>, %arg11: memref<128x128xf32, #tpu.memory_space<vmem>>, %arg12: memref<1x128xf32, #tpu.memory_space<vmem>>, %arg13: memref<32x128xf32, #tpu.memory_space<vmem>>) attributes {dimension_semantics = [#tpu.dimension_semantics<arbitrary>], iteration_bounds = array<i64: 1>, scalar_prefetch = 0 : i64, scratch_operands = 0 : i64, tpu.core_type = #tpu.core_type<tc>, window_params = [{pipeline_mode = #tpu.pipeline_mode<synchronous>, transform_indices = @transform_0, window_bounds = array<i64: 32, 128>}, {pipeline_mode = #tpu.pipeline_mode<synchronous>, transform_indices = @transform_1, window_bounds = array<i64: 1, 128>}, {pipeline_mode = #tpu.pipeline_mode<synchronous>, transform_indices = @transform_2, window_bounds = array<i64: 1, 128>}, {pipeline_mode = #tpu.pipeline_mode<synchronous>, transform_indices = @transform_3, window_bounds = array<i64: 128, 384>}, {pipeline_mode = #tpu.pipeline_mode<synchronous>, transform_indices = @transform_4, window_bounds = array<i64: 128, 128>}, {pipeline_mode = #tpu.pipeline_mode<synchronous>, transform_indices = @transform_5, window_bounds = array<i64: 1, 128>}, {pipeline_mode = #tpu.pipeline_mode<synchronous>, transform_indices = @transform_6, window_bounds = array<i64: 1, 128>}, {pipeline_mode = #tpu.pipeline_mode<synchronous>, transform_indices = @transform_7, window_bounds = array<i64: 1, 128>}, {pipeline_mode = #tpu.pipeline_mode<synchronous>, transform_indices = @transform_8, window_bounds = array<i64: 128, 128>}, {pipeline_mode = #tpu.pipeline_mode<synchronous>, transform_indices = @transform_9, window_bounds = array<i64: 1, 128>}, {pipeline_mode = #tpu.pipeline_mode<synchronous>, transform_indices = @transform_10, window_bounds = array<i64: 128, 128>}, {pipeline_mode = #tpu.pipeline_mode<synchronous>, transform_indices = @transform_11, window_bounds = array<i64: 1, 128>}, {pipeline_mode = #tpu.pipeline_mode<synchronous>, transform_indices = @transform_12, window_bounds = array<i64: 32, 128>}]} {
    %c0 = arith.constant 0 : index
    %c0_0 = arith.constant 0 : index
    %0 = vector.load %arg1[%c0, %c0_0] : memref<32x128xf32, #tpu.memory_space<vmem>>, vector<32x128xf32>
    %cst = arith.constant dense<0.000000e+00> : vector<32xf32>
    %1 = vector.multi_reduction <add>, %0, %cst [1] : vector<32x128xf32> to vector<32xf32>
    %2 = vector.shape_cast %1 : vector<32xf32> to vector<32x1xf32>
    %cst_1 = arith.constant 1.280000e+02 : f32
    %3 = vector.broadcast %cst_1 : f32 to vector<32x1xf32>
    %4 = arith.divf %2, %3 : vector<32x1xf32>
    %5 = vector.broadcast %4 : vector<32x1xf32> to vector<32x128xf32>
    %6 = arith.subf %0, %5 : vector<32x128xf32>
    %7 = arith.mulf %6, %6 : vector<32x128xf32>
    %cst_2 = arith.constant dense<0.000000e+00> : vector<32xf32>
    %8 = vector.multi_reduction <add>, %7, %cst_2 [1] : vector<32x128xf32> to vector<32xf32>
    %9 = vector.shape_cast %8 : vector<32xf32> to vector<32x1xf32>
    %cst_3 = arith.constant 1.280000e+02 : f32
    %10 = vector.broadcast %cst_3 : f32 to vector<32x1xf32>
    %11 = arith.divf %9, %10 : vector<32x1xf32>
    %12 = vector.broadcast %4 : vector<32x1xf32> to vector<32x128xf32>
    %13 = arith.subf %0, %12 : vector<32x128xf32>
    %cst_4 = arith.constant 9.99999997E-7 : f32
    %14 = vector.broadcast %cst_4 : f32 to vector<32x1xf32>
    %15 = arith.addf %11, %14 : vector<32x1xf32>
    %16 = math.rsqrt %15 : vector<32x1xf32>
    %17 = vector.broadcast %16 : vector<32x1xf32> to vector<32x128xf32>
    %18 = arith.mulf %13, %17 : vector<32x128xf32>
    %c0_5 = arith.constant 0 : index
    %c0_6 = arith.constant 0 : index
    %19 = vector.load %arg2[%c0_5, %c0_6] : memref<1x128xf32, #tpu.memory_space<vmem>>, vector<1x128xf32>
    %20 = vector.shape_cast %19 : vector<1x128xf32> to vector<128xf32>
    %21 = vector.shape_cast %20 : vector<128xf32> to vector<1x128xf32>
    %22 = vector.broadcast %21 : vector<1x128xf32> to vector<32x128xf32>
    %23 = arith.mulf %18, %22 : vector<32x128xf32>
    %c0_7 = arith.constant 0 : index
    %c0_8 = arith.constant 0 : index
    %24 = vector.load %arg3[%c0_7, %c0_8] : memref<1x128xf32, #tpu.memory_space<vmem>>, vector<1x128xf32>
    %25 = vector.shape_cast %24 : vector<1x128xf32> to vector<128xf32>
    %26 = vector.shape_cast %25 : vector<128xf32> to vector<1x128xf32>
    %27 = vector.broadcast %26 : vector<1x128xf32> to vector<32x128xf32>
    %28 = arith.addf %23, %27 : vector<32x128xf32>
    %29 = arith.truncf %28 : vector<32x128xf32> to vector<32x128xbf16>
    %c0_9 = arith.constant 0 : index
    %c0_10 = arith.constant 0 : index
    %30 = vector.load %arg4[%c0_9, %c0_10] : memref<128x384xf32, #tpu.memory_space<vmem>>, vector<128x384xf32>
    %31 = arith.truncf %30 : vector<128x384xf32> to vector<128x384xbf16>
    %cst_11 = arith.constant dense<0.000000e+00> : vector<32x384xf32>
    %32 = tpu.matmul %29, %31, %cst_11 {dimension_numbers = #tpu.dot_dimension_numbers<[1], [0], [0], [1], [0, 0, 1, 1], [], []>} : vector<32x128xbf16>, vector<128x384xbf16>, vector<32x384xf32> -> vector<32x384xf32>
    %33 = arith.truncf %32 : vector<32x384xf32> to vector<32x384xbf16>
    %34 = vector.extract_strided_slice %33 {offsets = [0, 0], sizes = [32, 128], strides = [1, 1]} : vector<32x384xbf16> to vector<32x128xbf16>
    %35 = vector.extract_strided_slice %33 {offsets = [0, 128], sizes = [32, 128], strides = [1, 1]} : vector<32x384xbf16> to vector<32x128xbf16>
    %36 = vector.extract_strided_slice %33 {offsets = [0, 256], sizes = [32, 128], strides = [1, 1]} : vector<32x384xbf16> to vector<32x128xbf16>
    %37 = tpu.iota {dimensions = array<i32: 0>} : vector<16x16xi32>
    %38 = tpu.iota {dimensions = array<i32: 1>} : vector<16x16xi32>
    %39 = arith.cmpi sge, %37, %38 : vector<16x16xi32>
    %cst_12 = arith.constant 0.000000e+00 : f32
    %cst_13 = arith.constant -1.000000e+30 : f32
    %40 = vector.broadcast %cst_12 : f32 to vector<16x16xf32>
    %41 = vector.broadcast %cst_13 : f32 to vector<16x16xf32>
    %42 = arith.select %39, %40, %41 : vector<16x16xi1>, vector<16x16xf32>
    %c0_14 = arith.constant 0 : index
    %c0_15 = arith.constant 0 : index
    %43 = vector.load %arg5[%c0_14, %c0_15] : memref<128x128xf32, #tpu.memory_space<vmem>>, vector<128x128xf32>
    %44 = arith.truncf %43 : vector<128x128xf32> to vector<128x128xbf16>
    %cst_16 = arith.constant 0.000000e+00 : f32
    %45 = vector.broadcast %cst_16 : f32 to vector<32x128xf32>
    %46 = vector.extract_strided_slice %34 {offsets = [0, 0], sizes = [32, 32], strides = [1, 1]} : vector<32x128xbf16> to vector<32x32xbf16>
    %47 = vector.shape_cast %46 : vector<32x32xbf16> to vector<2x16x32xbf16>
    %48 = vector.extract_strided_slice %35 {offsets = [0, 0], sizes = [32, 32], strides = [1, 1]} : vector<32x128xbf16> to vector<32x32xbf16>
    %49 = vector.shape_cast %48 : vector<32x32xbf16> to vector<2x16x32xbf16>
    %50 = vector.extract_strided_slice %36 {offsets = [0, 0], sizes = [32, 32], strides = [1, 1]} : vector<32x128xbf16> to vector<32x32xbf16>
    %51 = vector.shape_cast %50 : vector<32x32xbf16> to vector<2x16x32xbf16>
    "tpu.trace_start"() <{level = 10 : i32, message = "bqd,bkd->bqk"}> : () -> ()
    %cst_17 = arith.constant dense<0.000000e+00> : vector<2x16x16xf32>
    %52 = tpu.matmul %47, %49, %cst_17 {dimension_numbers = #tpu.dot_dimension_numbers<[2], [2], [1], [1], [0, 0, 0, 1, 1, 1], [0], [0]>} : vector<2x16x32xbf16>, vector<2x16x32xbf16>, vector<2x16x16xf32> -> vector<2x16x16xf32>
    "tpu.trace_stop"() : () -> ()
    %cst_18 = arith.constant 0.0883883461 : f32
    %53 = vector.broadcast %cst_18 : f32 to vector<2x16x16xf32>
    %54 = arith.mulf %52, %53 : vector<2x16x16xf32>
    %55 = vector.shape_cast %42 : vector<16x16xf32> to vector<1x16x16xf32>
    %56 = vector.broadcast %55 : vector<1x16x16xf32> to vector<2x16x16xf32>
    %57 = arith.addf %54, %56 : vector<2x16x16xf32>
    %cst_19 = arith.constant dense<0xFF800000> : vector<2x16xf32>
    %58 = vector.multi_reduction <maximumf>, %57, %cst_19 [2] : vector<2x16x16xf32> to vector<2x16xf32>
    %59 = vector.shape_cast %58 : vector<2x16xf32> to vector<2x16x1xf32>
    %60 = vector.broadcast %59 : vector<2x16x1xf32> to vector<2x16x16xf32>
    %61 = arith.subf %57, %60 : vector<2x16x16xf32>
    %62 = math.exp %61 : vector<2x16x16xf32>
    %cst_20 = arith.constant dense<0.000000e+00> : vector<2x16xf32>
    %63 = vector.multi_reduction <add>, %62, %cst_20 [2] : vector<2x16x16xf32> to vector<2x16xf32>
    %64 = vector.shape_cast %63 : vector<2x16xf32> to vector<2x16x1xf32>
    %65 = tpu.reciprocal %64 {approx = true} : vector<2x16x1xf32> -> vector<2x16x1xf32>
    %66 = vector.broadcast %65 : vector<2x16x1xf32> to vector<2x16x16xf32>
    %67 = arith.mulf %62, %66 : vector<2x16x16xf32>
    %68 = arith.truncf %67 : vector<2x16x16xf32> to vector<2x16x16xbf16>
    "tpu.trace_start"() <{level = 10 : i32, message = "bqk,bkd->bqd"}> : () -> ()
    %cst_21 = arith.constant dense<0.000000e+00> : vector<2x16x32xf32>
    %69 = tpu.matmul %68, %51, %cst_21 {dimension_numbers = #tpu.dot_dimension_numbers<[2], [1], [1], [2], [0, 0, 0, 1, 1, 2], [0], [0]>} : vector<2x16x16xbf16>, vector<2x16x32xbf16>, vector<2x16x32xf32> -> vector<2x16x32xf32>
    "tpu.trace_stop"() : () -> ()
    %70 = vector.shape_cast %69 : vector<2x16x32xf32> to vector<32x32xf32>
    %71 = arith.truncf %70 : vector<32x32xf32> to vector<32x32xbf16>
    %72 = vector.extract_strided_slice %44 {offsets = [0, 0], sizes = [32, 128], strides = [1, 1]} : vector<128x128xbf16> to vector<32x128xbf16>
    %cst_22 = arith.constant dense<0.000000e+00> : vector<32x128xf32>
    %73 = tpu.matmul %71, %72, %cst_22 {dimension_numbers = #tpu.dot_dimension_numbers<[1], [0], [0], [1], [0, 0, 1, 1], [], []>} : vector<32x32xbf16>, vector<32x128xbf16>, vector<32x128xf32> -> vector<32x128xf32>
    %74 = arith.addf %45, %73 : vector<32x128xf32>
    %75 = vector.extract_strided_slice %34 {offsets = [0, 32], sizes = [32, 32], strides = [1, 1]} : vector<32x128xbf16> to vector<32x32xbf16>
    %76 = vector.shape_cast %75 : vector<32x32xbf16> to vector<2x16x32xbf16>
    %77 = vector.extract_strided_slice %35 {offsets = [0, 32], sizes = [32, 32], strides = [1, 1]} : vector<32x128xbf16> to vector<32x32xbf16>
    %78 = vector.shape_cast %77 : vector<32x32xbf16> to vector<2x16x32xbf16>
    %79 = vector.extract_strided_slice %36 {offsets = [0, 32], sizes = [32, 32], strides = [1, 1]} : vector<32x128xbf16> to vector<32x32xbf16>
    %80 = vector.shape_cast %79 : vector<32x32xbf16> to vector<2x16x32xbf16>
    "tpu.trace_start"() <{level = 10 : i32, message = "bqd,bkd->bqk"}> : () -> ()
    %cst_23 = arith.constant dense<0.000000e+00> : vector<2x16x16xf32>
    %81 = tpu.matmul %76, %78, %cst_23 {dimension_numbers = #tpu.dot_dimension_numbers<[2], [2], [1], [1], [0, 0, 0, 1, 1, 1], [0], [0]>} : vector<2x16x32xbf16>, vector<2x16x32xbf16>, vector<2x16x16xf32> -> vector<2x16x16xf32>
    "tpu.trace_stop"() : () -> ()
    %cst_24 = arith.constant 0.0883883461 : f32
    %82 = vector.broadcast %cst_24 : f32 to vector<2x16x16xf32>
    %83 = arith.mulf %81, %82 : vector<2x16x16xf32>
    %84 = vector.shape_cast %42 : vector<16x16xf32> to vector<1x16x16xf32>
    %85 = vector.broadcast %84 : vector<1x16x16xf32> to vector<2x16x16xf32>
    %86 = arith.addf %83, %85 : vector<2x16x16xf32>
    %cst_25 = arith.constant dense<0xFF800000> : vector<2x16xf32>
    %87 = vector.multi_reduction <maximumf>, %86, %cst_25 [2] : vector<2x16x16xf32> to vector<2x16xf32>
    %88 = vector.shape_cast %87 : vector<2x16xf32> to vector<2x16x1xf32>
    %89 = vector.broadcast %88 : vector<2x16x1xf32> to vector<2x16x16xf32>
    %90 = arith.subf %86, %89 : vector<2x16x16xf32>
    %91 = math.exp %90 : vector<2x16x16xf32>
    %cst_26 = arith.constant dense<0.000000e+00> : vector<2x16xf32>
    %92 = vector.multi_reduction <add>, %91, %cst_26 [2] : vector<2x16x16xf32> to vector<2x16xf32>
    %93 = vector.shape_cast %92 : vector<2x16xf32> to vector<2x16x1xf32>
    %94 = tpu.reciprocal %93 {approx = true} : vector<2x16x1xf32> -> vector<2x16x1xf32>
    %95 = vector.broadcast %94 : vector<2x16x1xf32> to vector<2x16x16xf32>
    %96 = arith.mulf %91, %95 : vector<2x16x16xf32>
    %97 = arith.truncf %96 : vector<2x16x16xf32> to vector<2x16x16xbf16>
    "tpu.trace_start"() <{level = 10 : i32, message = "bqk,bkd->bqd"}> : () -> ()
    %cst_27 = arith.constant dense<0.000000e+00> : vector<2x16x32xf32>
    %98 = tpu.matmul %97, %80, %cst_27 {dimension_numbers = #tpu.dot_dimension_numbers<[2], [1], [1], [2], [0, 0, 0, 1, 1, 2], [0], [0]>} : vector<2x16x16xbf16>, vector<2x16x32xbf16>, vector<2x16x32xf32> -> vector<2x16x32xf32>
    "tpu.trace_stop"() : () -> ()
    %99 = vector.shape_cast %98 : vector<2x16x32xf32> to vector<32x32xf32>
    %100 = arith.truncf %99 : vector<32x32xf32> to vector<32x32xbf16>
    %101 = vector.extract_strided_slice %44 {offsets = [32, 0], sizes = [32, 128], strides = [1, 1]} : vector<128x128xbf16> to vector<32x128xbf16>
    %cst_28 = arith.constant dense<0.000000e+00> : vector<32x128xf32>
    %102 = tpu.matmul %100, %101, %cst_28 {dimension_numbers = #tpu.dot_dimension_numbers<[1], [0], [0], [1], [0, 0, 1, 1], [], []>} : vector<32x32xbf16>, vector<32x128xbf16>, vector<32x128xf32> -> vector<32x128xf32>
    %103 = arith.addf %74, %102 : vector<32x128xf32>
    %104 = vector.extract_strided_slice %34 {offsets = [0, 64], sizes = [32, 32], strides = [1, 1]} : vector<32x128xbf16> to vector<32x32xbf16>
    %105 = vector.shape_cast %104 : vector<32x32xbf16> to vector<2x16x32xbf16>
    %106 = vector.extract_strided_slice %35 {offsets = [0, 64], sizes = [32, 32], strides = [1, 1]} : vector<32x128xbf16> to vector<32x32xbf16>
    %107 = vector.shape_cast %106 : vector<32x32xbf16> to vector<2x16x32xbf16>
    %108 = vector.extract_strided_slice %36 {offsets = [0, 64], sizes = [32, 32], strides = [1, 1]} : vector<32x128xbf16> to vector<32x32xbf16>
    %109 = vector.shape_cast %108 : vector<32x32xbf16> to vector<2x16x32xbf16>
    "tpu.trace_start"() <{level = 10 : i32, message = "bqd,bkd->bqk"}> : () -> ()
    %cst_29 = arith.constant dense<0.000000e+00> : vector<2x16x16xf32>
    %110 = tpu.matmul %105, %107, %cst_29 {dimension_numbers = #tpu.dot_dimension_numbers<[2], [2], [1], [1], [0, 0, 0, 1, 1, 1], [0], [0]>} : vector<2x16x32xbf16>, vector<2x16x32xbf16>, vector<2x16x16xf32> -> vector<2x16x16xf32>
    "tpu.trace_stop"() : () -> ()
    %cst_30 = arith.constant 0.0883883461 : f32
    %111 = vector.broadcast %cst_30 : f32 to vector<2x16x16xf32>
    %112 = arith.mulf %110, %111 : vector<2x16x16xf32>
    %113 = vector.shape_cast %42 : vector<16x16xf32> to vector<1x16x16xf32>
    %114 = vector.broadcast %113 : vector<1x16x16xf32> to vector<2x16x16xf32>
    %115 = arith.addf %112, %114 : vector<2x16x16xf32>
    %cst_31 = arith.constant dense<0xFF800000> : vector<2x16xf32>
    %116 = vector.multi_reduction <maximumf>, %115, %cst_31 [2] : vector<2x16x16xf32> to vector<2x16xf32>
    %117 = vector.shape_cast %116 : vector<2x16xf32> to vector<2x16x1xf32>
    %118 = vector.broadcast %117 : vector<2x16x1xf32> to vector<2x16x16xf32>
    %119 = arith.subf %115, %118 : vector<2x16x16xf32>
    %120 = math.exp %119 : vector<2x16x16xf32>
    %cst_32 = arith.constant dense<0.000000e+00> : vector<2x16xf32>
    %121 = vector.multi_reduction <add>, %120, %cst_32 [2] : vector<2x16x16xf32> to vector<2x16xf32>
    %122 = vector.shape_cast %121 : vector<2x16xf32> to vector<2x16x1xf32>
    %123 = tpu.reciprocal %122 {approx = true} : vector<2x16x1xf32> -> vector<2x16x1xf32>
    %124 = vector.broadcast %123 : vector<2x16x1xf32> to vector<2x16x16xf32>
    %125 = arith.mulf %120, %124 : vector<2x16x16xf32>
    %126 = arith.truncf %125 : vector<2x16x16xf32> to vector<2x16x16xbf16>
    "tpu.trace_start"() <{level = 10 : i32, message = "bqk,bkd->bqd"}> : () -> ()
    %cst_33 = arith.constant dense<0.000000e+00> : vector<2x16x32xf32>
    %127 = tpu.matmul %126, %109, %cst_33 {dimension_numbers = #tpu.dot_dimension_numbers<[2], [1], [1], [2], [0, 0, 0, 1, 1, 2], [0], [0]>} : vector<2x16x16xbf16>, vector<2x16x32xbf16>, vector<2x16x32xf32> -> vector<2x16x32xf32>
    "tpu.trace_stop"() : () -> ()
    %128 = vector.shape_cast %127 : vector<2x16x32xf32> to vector<32x32xf32>
    %129 = arith.truncf %128 : vector<32x32xf32> to vector<32x32xbf16>
    %130 = vector.extract_strided_slice %44 {offsets = [64, 0], sizes = [32, 128], strides = [1, 1]} : vector<128x128xbf16> to vector<32x128xbf16>
    %cst_34 = arith.constant dense<0.000000e+00> : vector<32x128xf32>
    %131 = tpu.matmul %129, %130, %cst_34 {dimension_numbers = #tpu.dot_dimension_numbers<[1], [0], [0], [1], [0, 0, 1, 1], [], []>} : vector<32x32xbf16>, vector<32x128xbf16>, vector<32x128xf32> -> vector<32x128xf32>
    %132 = arith.addf %103, %131 : vector<32x128xf32>
    %133 = vector.extract_strided_slice %34 {offsets = [0, 96], sizes = [32, 32], strides = [1, 1]} : vector<32x128xbf16> to vector<32x32xbf16>
    %134 = vector.shape_cast %133 : vector<32x32xbf16> to vector<2x16x32xbf16>
    %135 = vector.extract_strided_slice %35 {offsets = [0, 96], sizes = [32, 32], strides = [1, 1]} : vector<32x128xbf16> to vector<32x32xbf16>
    %136 = vector.shape_cast %135 : vector<32x32xbf16> to vector<2x16x32xbf16>
    %137 = vector.extract_strided_slice %36 {offsets = [0, 96], sizes = [32, 32], strides = [1, 1]} : vector<32x128xbf16> to vector<32x32xbf16>
    %138 = vector.shape_cast %137 : vector<32x32xbf16> to vector<2x16x32xbf16>
    "tpu.trace_start"() <{level = 10 : i32, message = "bqd,bkd->bqk"}> : () -> ()
    %cst_35 = arith.constant dense<0.000000e+00> : vector<2x16x16xf32>
    %139 = tpu.matmul %134, %136, %cst_35 {dimension_numbers = #tpu.dot_dimension_numbers<[2], [2], [1], [1], [0, 0, 0, 1, 1, 1], [0], [0]>} : vector<2x16x32xbf16>, vector<2x16x32xbf16>, vector<2x16x16xf32> -> vector<2x16x16xf32>
    "tpu.trace_stop"() : () -> ()
    %cst_36 = arith.constant 0.0883883461 : f32
    %140 = vector.broadcast %cst_36 : f32 to vector<2x16x16xf32>
    %141 = arith.mulf %139, %140 : vector<2x16x16xf32>
    %142 = vector.shape_cast %42 : vector<16x16xf32> to vector<1x16x16xf32>
    %143 = vector.broadcast %142 : vector<1x16x16xf32> to vector<2x16x16xf32>
    %144 = arith.addf %141, %143 : vector<2x16x16xf32>
    %cst_37 = arith.constant dense<0xFF800000> : vector<2x16xf32>
    %145 = vector.multi_reduction <maximumf>, %144, %cst_37 [2] : vector<2x16x16xf32> to vector<2x16xf32>
    %146 = vector.shape_cast %145 : vector<2x16xf32> to vector<2x16x1xf32>
    %147 = vector.broadcast %146 : vector<2x16x1xf32> to vector<2x16x16xf32>
    %148 = arith.subf %144, %147 : vector<2x16x16xf32>
    %149 = math.exp %148 : vector<2x16x16xf32>
    %cst_38 = arith.constant dense<0.000000e+00> : vector<2x16xf32>
    %150 = vector.multi_reduction <add>, %149, %cst_38 [2] : vector<2x16x16xf32> to vector<2x16xf32>
    %151 = vector.shape_cast %150 : vector<2x16xf32> to vector<2x16x1xf32>
    %152 = tpu.reciprocal %151 {approx = true} : vector<2x16x1xf32> -> vector<2x16x1xf32>
    %153 = vector.broadcast %152 : vector<2x16x1xf32> to vector<2x16x16xf32>
    %154 = arith.mulf %149, %153 : vector<2x16x16xf32>
    %155 = arith.truncf %154 : vector<2x16x16xf32> to vector<2x16x16xbf16>
    "tpu.trace_start"() <{level = 10 : i32, message = "bqk,bkd->bqd"}> : () -> ()
    %cst_39 = arith.constant dense<0.000000e+00> : vector<2x16x32xf32>
    %156 = tpu.matmul %155, %138, %cst_39 {dimension_numbers = #tpu.dot_dimension_numbers<[2], [1], [1], [2], [0, 0, 0, 1, 1, 2], [0], [0]>} : vector<2x16x16xbf16>, vector<2x16x32xbf16>, vector<2x16x32xf32> -> vector<2x16x32xf32>
    "tpu.trace_stop"() : () -> ()
    %157 = vector.shape_cast %156 : vector<2x16x32xf32> to vector<32x32xf32>
    %158 = arith.truncf %157 : vector<32x32xf32> to vector<32x32xbf16>
    %159 = vector.extract_strided_slice %44 {offsets = [96, 0], sizes = [32, 128], strides = [1, 1]} : vector<128x128xbf16> to vector<32x128xbf16>
    %cst_40 = arith.constant dense<0.000000e+00> : vector<32x128xf32>
    %160 = tpu.matmul %158, %159, %cst_40 {dimension_numbers = #tpu.dot_dimension_numbers<[1], [0], [0], [1], [0, 0, 1, 1], [], []>} : vector<32x32xbf16>, vector<32x128xbf16>, vector<32x128xf32> -> vector<32x128xf32>
    %161 = arith.addf %132, %160 : vector<32x128xf32>
    %c0_41 = arith.constant 0 : index
    %c0_42 = arith.constant 0 : index
    %162 = vector.load %arg6[%c0_41, %c0_42] : memref<1x128xf32, #tpu.memory_space<vmem>>, vector<1x128xf32>
    %163 = vector.shape_cast %162 : vector<1x128xf32> to vector<128xf32>
    %164 = vector.shape_cast %163 : vector<128xf32> to vector<1x128xf32>
    %165 = vector.broadcast %164 : vector<1x128xf32> to vector<32x128xf32>
    %166 = arith.addf %161, %165 : vector<32x128xf32>
    %167 = arith.addf %0, %166 : vector<32x128xf32>
    %cst_43 = arith.constant dense<0.000000e+00> : vector<32xf32>
    %168 = vector.multi_reduction <add>, %167, %cst_43 [1] : vector<32x128xf32> to vector<32xf32>
    %169 = vector.shape_cast %168 : vector<32xf32> to vector<32x1xf32>
    %cst_44 = arith.constant 1.280000e+02 : f32
    %170 = vector.broadcast %cst_44 : f32 to vector<32x1xf32>
    %171 = arith.divf %169, %170 : vector<32x1xf32>
    %172 = vector.broadcast %171 : vector<32x1xf32> to vector<32x128xf32>
    %173 = arith.subf %167, %172 : vector<32x128xf32>
    %174 = arith.mulf %173, %173 : vector<32x128xf32>
    %cst_45 = arith.constant dense<0.000000e+00> : vector<32xf32>
    %175 = vector.multi_reduction <add>, %174, %cst_45 [1] : vector<32x128xf32> to vector<32xf32>
    %176 = vector.shape_cast %175 : vector<32xf32> to vector<32x1xf32>
    %cst_46 = arith.constant 1.280000e+02 : f32
    %177 = vector.broadcast %cst_46 : f32 to vector<32x1xf32>
    %178 = arith.divf %176, %177 : vector<32x1xf32>
    %179 = vector.broadcast %171 : vector<32x1xf32> to vector<32x128xf32>
    %180 = arith.subf %167, %179 : vector<32x128xf32>
    %cst_47 = arith.constant 9.99999997E-7 : f32
    %181 = vector.broadcast %cst_47 : f32 to vector<32x1xf32>
    %182 = arith.addf %178, %181 : vector<32x1xf32>
    %183 = math.rsqrt %182 : vector<32x1xf32>
    %184 = vector.broadcast %183 : vector<32x1xf32> to vector<32x128xf32>
    %185 = arith.mulf %180, %184 : vector<32x128xf32>
    %c0_48 = arith.constant 0 : index
    %c0_49 = arith.constant 0 : index
    %186 = vector.load %arg7[%c0_48, %c0_49] : memref<1x128xf32, #tpu.memory_space<vmem>>, vector<1x128xf32>
    %187 = vector.shape_cast %186 : vector<1x128xf32> to vector<128xf32>
    %188 = vector.shape_cast %187 : vector<128xf32> to vector<1x128xf32>
    %189 = vector.broadcast %188 : vector<1x128xf32> to vector<32x128xf32>
    %190 = arith.mulf %185, %189 : vector<32x128xf32>
    %c0_50 = arith.constant 0 : index
    %c0_51 = arith.constant 0 : index
    %191 = vector.load %arg8[%c0_50, %c0_51] : memref<1x128xf32, #tpu.memory_space<vmem>>, vector<1x128xf32>
    %192 = vector.shape_cast %191 : vector<1x128xf32> to vector<128xf32>
    %193 = vector.shape_cast %192 : vector<128xf32> to vector<1x128xf32>
    %194 = vector.broadcast %193 : vector<1x128xf32> to vector<32x128xf32>
    %195 = arith.addf %190, %194 : vector<32x128xf32>
    %196 = arith.truncf %195 : vector<32x128xf32> to vector<32x128xbf16>
    %c0_52 = arith.constant 0 : index
    %c0_53 = arith.constant 0 : index
    %197 = vector.load %arg9[%c0_52, %c0_53] : memref<128x128xf32, #tpu.memory_space<vmem>>, vector<128x128xf32>
    %198 = arith.truncf %197 : vector<128x128xf32> to vector<128x128xbf16>
    %cst_54 = arith.constant dense<0.000000e+00> : vector<32x128xf32>
    %199 = tpu.matmul %196, %198, %cst_54 {dimension_numbers = #tpu.dot_dimension_numbers<[1], [0], [0], [1], [0, 0, 1, 1], [], []>} : vector<32x128xbf16>, vector<128x128xbf16>, vector<32x128xf32> -> vector<32x128xf32>
    %c0_55 = arith.constant 0 : index
    %c0_56 = arith.constant 0 : index
    %200 = vector.load %arg10[%c0_55, %c0_56] : memref<1x128xf32, #tpu.memory_space<vmem>>, vector<1x128xf32>
    %201 = vector.shape_cast %200 : vector<1x128xf32> to vector<128xf32>
    %202 = vector.shape_cast %201 : vector<128xf32> to vector<1x128xf32>
    %203 = vector.broadcast %202 : vector<1x128xf32> to vector<32x128xf32>
    %204 = arith.addf %199, %203 : vector<32x128xf32>
    %cst_57 = arith.constant 0.000000e+00 : f32
    %205 = vector.broadcast %cst_57 : f32 to vector<32x128xf32>
    %206 = arith.maximumf %204, %205 : vector<32x128xf32>
    %207 = arith.truncf %206 : vector<32x128xf32> to vector<32x128xbf16>
    %c0_58 = arith.constant 0 : index
    %c0_59 = arith.constant 0 : index
    %208 = vector.load %arg11[%c0_58, %c0_59] : memref<128x128xf32, #tpu.memory_space<vmem>>, vector<128x128xf32>
    %209 = arith.truncf %208 : vector<128x128xf32> to vector<128x128xbf16>
    %cst_60 = arith.constant dense<0.000000e+00> : vector<32x128xf32>
    %210 = tpu.matmul %207, %209, %cst_60 {dimension_numbers = #tpu.dot_dimension_numbers<[1], [0], [0], [1], [0, 0, 1, 1], [], []>} : vector<32x128xbf16>, vector<128x128xbf16>, vector<32x128xf32> -> vector<32x128xf32>
    %c0_61 = arith.constant 0 : index
    %c0_62 = arith.constant 0 : index
    %211 = vector.load %arg12[%c0_61, %c0_62] : memref<1x128xf32, #tpu.memory_space<vmem>>, vector<1x128xf32>
    %212 = vector.shape_cast %211 : vector<1x128xf32> to vector<128xf32>
    %213 = vector.shape_cast %212 : vector<128xf32> to vector<1x128xf32>
    %214 = vector.broadcast %213 : vector<1x128xf32> to vector<32x128xf32>
    %215 = arith.addf %210, %214 : vector<32x128xf32>
    %216 = arith.addf %167, %215 : vector<32x128xf32>
    %c0_63 = arith.constant 0 : index
    %c0_64 = arith.constant 0 : index
    %217 = vector.load %arg13[%c0_63, %c0_64] : memref<32x128xf32, #tpu.memory_space<vmem>>, vector<32x128xf32>
    tpu.vector_store %arg13[%c0_63, %c0_64], %216 {strides = array<i32>} : memref<32x128xf32, #tpu.memory_space<vmem>>, vector<32x128xf32>,
    return
  }
  func.func @transform_0(%arg0: i32) -> (i32, i32) {
    %c0_i32 = arith.constant 0 : i32
    %c0_i32_0 = arith.constant 0 : i32
    %c0_i32_1 = arith.constant 0 : i32
    return %c0_i32, %c0_i32_0 : i32, i32
  }
  func.func @transform_1(%arg0: i32) -> (i32, i32) {
    %c0_i32 = arith.constant 0 : i32
    %c0_i32_0 = arith.constant 0 : i32
    %c0_i32_1 = arith.constant 0 : i32
    return %c0_i32, %c0_i32_0 : i32, i32
  }
  func.func @transform_2(%arg0: i32) -> (i32, i32) {
    %c0_i32 = arith.constant 0 : i32
    %c0_i32_0 = arith.constant 0 : i32
    %c0_i32_1 = arith.constant 0 : i32
    return %c0_i32, %c0_i32_0 : i32, i32
  }
  func.func @transform_3(%arg0: i32) -> (i32, i32) {
    %c0_i32 = arith.constant 0 : i32
    %c0_i32_0 = arith.constant 0 : i32
    %c0_i32_1 = arith.constant 0 : i32
    return %c0_i32, %c0_i32_0 : i32, i32
  }
  func.func @transform_4(%arg0: i32) -> (i32, i32) {
    %c0_i32 = arith.constant 0 : i32
    %c0_i32_0 = arith.constant 0 : i32
    %c0_i32_1 = arith.constant 0 : i32
    return %c0_i32, %c0_i32_0 : i32, i32
  }
  func.func @transform_5(%arg0: i32) -> (i32, i32) {
    %c0_i32 = arith.constant 0 : i32
    %c0_i32_0 = arith.constant 0 : i32
    %c0_i32_1 = arith.constant 0 : i32
    return %c0_i32, %c0_i32_0 : i32, i32
  }
  func.func @transform_6(%arg0: i32) -> (i32, i32) {
    %c0_i32 = arith.constant 0 : i32
    %c0_i32_0 = arith.constant 0 : i32
    %c0_i32_1 = arith.constant 0 : i32
    return %c0_i32, %c0_i32_0 : i32, i32
  }
  func.func @transform_7(%arg0: i32) -> (i32, i32) {
    %c0_i32 = arith.constant 0 : i32
    %c0_i32_0 = arith.constant 0 : i32
    %c0_i32_1 = arith.constant 0 : i32
    return %c0_i32, %c0_i32_0 : i32, i32
  }
  func.func @transform_8(%arg0: i32) -> (i32, i32) {
    %c0_i32 = arith.constant 0 : i32
    %c0_i32_0 = arith.constant 0 : i32
    %c0_i32_1 = arith.constant 0 : i32
    return %c0_i32, %c0_i32_0 : i32, i32
  }
  func.func @transform_9(%arg0: i32) -> (i32, i32) {
    %c0_i32 = arith.constant 0 : i32
    %c0_i32_0 = arith.constant 0 : i32
    %c0_i32_1 = arith.constant 0 : i32
    return %c0_i32, %c0_i32_0 : i32, i32
  }
  func.func @transform_10(%arg0: i32) -> (i32, i32) {
    %c0_i32 = arith.constant 0 : i32
    %c0_i32_0 = arith.constant 0 : i32
    %c0_i32_1 = arith.constant 0 : i32
    return %c0_i32, %c0_i32_0 : i32, i32
  }
  func.func @transform_11(%arg0: i32) -> (i32, i32) {
    %c0_i32 = arith.constant 0 : i32
    %c0_i32_0 = arith.constant 0 : i32
    %c0_i32_1 = arith.constant 0 : i32
    return %c0_i32, %c0_i32_0 : i32, i32
  }
  func.func @transform_12(%arg0: i32) -> (i32, i32) {
    %c0_i32 = arith.constant 0 : i32
    %c0_i32_0 = arith.constant 0 : i32
    %c0_i32_1 = arith.constant 0 : i32
    return %c0_i32, %c0_i32_0 : i32, i32
  }
}

</mosaic_0001>

<llo_original>
// kernel: tpu_custom_call.1
$region0: #{tpu_custom_call.1}
  #allocation0 [shape = 'u32[]', space=smem, size = 0x4, offset = 0x4, fixed_abs, tag = 'smem constant byte address 0x4 - core index']
  #allocation1 [shape = 'u32[144,128]{1,0:T(1,128)}', space=vmem, size = 0x12000, scoped, tag = 'internal scratch']
  %s0 = inlined_call_operand.hbm [shape: f32[32,128], index: 0, kind: input, shape index: {}]
  %s1 = inlined_call_operand.vmem [shape: f32[1,128], index: 1, kind: input, shape index: {}]
  %s2 = inlined_call_operand.vmem [shape: f32[1,128], index: 2, kind: input, shape index: {}]
  %s3 = inlined_call_operand.hbm [shape: f32[128,384], index: 3, kind: input, shape index: {}]
  %s4 = inlined_call_operand.hbm [shape: f32[128,128], index: 4, kind: input, shape index: {}]
  %s5 = inlined_call_operand.vmem [shape: f32[1,128], index: 5, kind: input, shape index: {}]
  %s6 = inlined_call_operand.vmem [shape: f32[1,128], index: 6, kind: input, shape index: {}]
  %s7 = inlined_call_operand.vmem [shape: f32[1,128], index: 7, kind: input, shape index: {}]
  %s8 = inlined_call_operand.hbm [shape: f32[128,128], index: 8, kind: input, shape index: {}]
  %s9 = inlined_call_operand.vmem [shape: f32[1,128], index: 9, kind: input, shape index: {}]
  %s10 = inlined_call_operand.hbm [shape: f32[128,128], index: 10, kind: input, shape index: {}]
  %s11 = inlined_call_operand.vmem [shape: f32[1,128], index: 11, kind: input, shape index: {}]
  %s12 = inlined_call_operand.hbm [shape: f32[32,128], index: 12, kind: output, shape index: {}]
  %s13 = sld [smem:[#allocation0]]
  $region78: #{tpu_custom_call.1} parent=0
    _
  %s15 = ssub.s32 1, %s13
  %s16 = scalar_select 0, %s15, %s13
  $region1: #{tpu_custom_call.1} parent=0
    #allocation2 [shape = 'u8[16384]{0}', space=vmem, size = 0x4000, scoped, tag = 'input window, operand 0, single buffered']
    #allocation3 [shape = 's32[1]{0}', space=sflag, size = 0x4, scoped, tag = 'scoped memory for tpu_custom_call.1']
    #allocation4 [shape = 's32[1]{0}', space=sflag, size = 0x4, scoped, tag = 'scoped memory for tpu_custom_call.1']
    #allocation5 [shape = 'u8[196608]{0}', space=vmem, size = 0x30000, scoped, tag = 'input window, operand 3, single buffered']
    #allocation6 [shape = 's32[1]{0}', space=sflag, size = 0x4, scoped, tag = 'scoped memory for tpu_custom_call.1']
    #allocation7 [shape = 'u8[65536]{0}', space=vmem, size = 0x10000, scoped, tag = 'input window, operand 4, single buffered']
    #allocation8 [shape = 'u8[65536]{0}', space=vmem, size = 0x10000, scoped, tag = 'input window, operand 8, single buffered']
    #allocation9 [shape = 's32[1]{0}', space=sflag, size = 0x4, scoped, tag = 'scoped memory for tpu_custom_call.1']
    #allocation10 [shape = 'u8[65536]{0}', space=vmem, size = 0x10000, scoped, tag = 'input window, operand 10, single buffered']
    #allocation11 [shape = 'u8[16384]{0}', space=vmem, size = 0x4000, scoped, tag = 'output window, operand 0, single buffered']
    %17 = vsyncpa [#allocation3], 0
    %18 = vsyncpa [#allocation6], 0
    %19 = vsyncpa [#allocation9], 0
    %20 = vsyncpa [#allocation4], 0
    // Predicated region
    $region2: #{tpu_custom_call.1} parent=1 // pred_check
      _
    $region3: #{tpu_custom_call.1} parent=1 // pred_check_branch
      %22 = sbr.rel (0) target = $region5
    $region4: #{tpu_custom_call.1} parent=1 // pred_region
      %s24 = ssub.s32 512, 512
      %25 = vsyncadd [#allocation3], %s24
      %s26 = sshll.u32 [#allocation2], 4
      %s27 = int_to_ptr.vmem [resolvable:$true] %s26
      %32 = dma.hbm_to_vmem [thread:$0]  %s0, 512, %s27, [#allocation3], 128, 128, 8
    $region5: #{tpu_custom_call.1} parent=1 // pred_fallthru
      _
    // Predicated region
    $region6: #{tpu_custom_call.1} parent=1 // pred_check
      _
    $region7: #{tpu_custom_call.1} parent=1 // pred_check_branch
      %34 = sbr.rel (0) target = $region9
    $region8: #{tpu_custom_call.1} parent=1 // pred_region
      _
    $region9: #{tpu_custom_call.1} parent=1 // pred_fallthru
      _
    // Predicated region
    $region10: #{tpu_custom_call.1} parent=1 // pred_check
      _
    $region11: #{tpu_custom_call.1} parent=1 // pred_check_branch
      %36 = sbr.rel (0) target = $region13
    $region12: #{tpu_custom_call.1} parent=1 // pred_region
      _
    $region13: #{tpu_custom_call.1} parent=1 // pred_fallthru
      _
    // Predicated region
    $region14: #{tpu_custom_call.1} parent=1 // pred_check
      _
    $region15: #{tpu_custom_call.1} parent=1 // pred_check_branch
      %38 = sbr.rel (0) target = $region17
    $region16: #{tpu_custom_call.1} parent=1 // pred_region
      %s40 = ssub.s32 6144, 6144
      %41 = vsyncadd [#allocation6], %s40
      %s42 = sshll.u32 [#allocation5], 4
      %s43 = int_to_ptr.vmem [resolvable:$true] %s42
      %48 = dma.hbm_to_vmem [thread:$0]  %s3, 6144, %s43, [#allocation6], 384, 384, 24
    $region17: #{tpu_custom_call.1} parent=1 // pred_fallthru
      _
    // Predicated region
    $region18: #{tpu_custom_call.1} parent=1 // pred_check
      _
    $region19: #{tpu_custom_call.1} parent=1 // pred_check_branch
      %50 = sbr.rel (0) target = $region21
    $region20: #{tpu_custom_call.1} parent=1 // pred_region
      %s52 = ssub.s32 2048, 2048
      %53 = vsyncadd [#allocation6], %s52
      %s54 = sshll.u32 [#allocation7], 4
      %s55 = int_to_ptr.vmem [resolvable:$true] %s54
      %60 = dma.hbm_to_vmem [thread:$0]  %s4, 2048, %s55, [#allocation6], 128, 128, 8
    $region21: #{tpu_custom_call.1} parent=1 // pred_fallthru
      _
    // Predicated region
    $region22: #{tpu_custom_call.1} parent=1 // pred_check
      _
    $region23: #{tpu_custom_call.1} parent=1 // pred_check_branch
      %62 = sbr.rel (0) target = $region25
    $region24: #{tpu_custom_call.1} parent=1 // pred_region
      _
    $region25: #{tpu_custom_call.1} parent=1 // pred_fallthru
      _
    // Predicated region
    $region26: #{tpu_custom_call.1} parent=1 // pred_check
      _
    $region27: #{tpu_custom_call.1} parent=1 // pred_check_branch
      %64 = sbr.rel (0) target = $region29
    $region28: #{tpu_custom_call.1} parent=1 // pred_region
      _
    $region29: #{tpu_custom_call.1} parent=1 // pred_fallthru
      _
    // Predicated region
    $region30: #{tpu_custom_call.1} parent=1 // pred_check
      _
    $region31: #{tpu_custom_call.1} parent=1 // pred_check_branch
      %66 = sbr.rel (0) target = $region33
    $region32: #{tpu_custom_call.1} parent=1 // pred_region
      _
    $region33: #{tpu_custom_call.1} parent=1 // pred_fallthru
      _
    // Predicated region
    $region34: #{tpu_custom_call.1} parent=1 // pred_check
      _
    $region35: #{tpu_custom_call.1} parent=1 // pred_check_branch
      %68 = sbr.rel (0) target = $region37
    $region36: #{tpu_custom_call.1} parent=1 // pred_region
      %s70 = ssub.s32 2048, 2048
      %71 = vsyncadd [#allocation9], %s70
      %s72 = sshll.u32 [#allocation8], 4
      %s73 = int_to_ptr.vmem [resolvable:$true] %s72
      %78 = dma.hbm_to_vmem [thread:$0]  %s8, 2048, %s73, [#allocation9], 128, 128, 8
    $region37: #{tpu_custom_call.1} parent=1 // pred_fallthru
      _
    // Predicated region
    $region38: #{tpu_custom_call.1} parent=1 // pred_check
      _
    $region39: #{tpu_custom_call.1} parent=1 // pred_check_branch
      %80 = sbr.rel (0) target = $region41
    $region40: #{tpu_custom_call.1} parent=1 // pred_region
      _
    $region41: #{tpu_custom_call.1} parent=1 // pred_fallthru
      _
    // Predicated region
    $region42: #{tpu_custom_call.1} parent=1 // pred_check
      _
    $region43: #{tpu_custom_call.1} parent=1 // pred_check_branch
      %82 = sbr.rel (0) target = $region45
    $region44: #{tpu_custom_call.1} parent=1 // pred_region
      %s84 = ssub.s32 2048, 2048
      %85 = vsyncadd [#allocation9], %s84
      %s86 = sshll.u32 [#allocation10], 4
      %s87 = int_to_ptr.vmem [resolvable:$true] %s86
      %92 = dma.hbm_to_vmem [thread:$0]  %s10, 2048, %s87, [#allocation9], 128, 128, 8
    $region45: #{tpu_custom_call.1} parent=1 // pred_fallthru
      _
    // Predicated region
    $region46: #{tpu_custom_call.1} parent=1 // pred_check
      _
    $region47: #{tpu_custom_call.1} parent=1 // pred_check_branch
      %94 = sbr.rel (0) target = $region49
    $region48: #{tpu_custom_call.1} parent=1 // pred_region
      _
    $region49: #{tpu_custom_call.1} parent=1 // pred_fallthru
      _
    // Predicated region
    $region50: #{tpu_custom_call.1} parent=1 // pred_check
      _
    $region51: #{tpu_custom_call.1} parent=1 // pred_check_branch
      %96 = sbr.rel (0) target = $region53
    $region52: #{tpu_custom_call.1} parent=1 // pred_region
      %97 = dma.done [#allocation3], 512
    $region53: #{tpu_custom_call.1} parent=1 // pred_fallthru
      _
    // Predicated region
    $region54: #{tpu_custom_call.1} parent=1 // pred_check
      _
    $region55: #{tpu_custom_call.1} parent=1 // pred_check_branch
      %99 = sbr.rel (0) target = $region57
    $region56: #{tpu_custom_call.1} parent=1 // pred_region
      %100 = dma.done [#allocation6], 6144
    $region57: #{tpu_custom_call.1} parent=1 // pred_fallthru
      _
    // Predicated region
    $region58: #{tpu_custom_call.1} parent=1 // pred_check
      _
    $region59: #{tpu_custom_call.1} parent=1 // pred_check_branch
      %102 = sbr.rel (0) target = $region61
    $region60: #{tpu_custom_call.1} parent=1 // pred_region
      %103 = dma.done [#allocation6], 2048
    $region61: #{tpu_custom_call.1} parent=1 // pred_fallthru
      _
    // Predicated region
    $region62: #{tpu_custom_call.1} parent=1 // pred_check
      _
    $region63: #{tpu_custom_call.1} parent=1 // pred_check_branch
      %105 = sbr.rel (0) target = $region65
    $region64: #{tpu_custom_call.1} parent=1 // pred_region
      %106 = dma.done [#allocation9], 2048
    $region65: #{tpu_custom_call.1} parent=1 // pred_fallthru
      _
    // Predicated region
    $region66: #{tpu_custom_call.1} parent=1 // pred_check
      _
    $region67: #{tpu_custom_call.1} parent=1 // pred_check_branch
      %108 = sbr.rel (0) target = $region69
    $region68: #{tpu_custom_call.1} parent=1 // pred_region
      %109 = dma.done [#allocation9], 2048
    $region69: #{tpu_custom_call.1} parent=1 // pred_fallthru
      _
    %v111 = vld [vmem:[#allocation2] sm:$0xff]
    %v112 = vld [vmem:[#allocation2 + $0x8] sm:$0xff]
    %v113 = vld [vmem:[#allocation2 + $0x10] sm:$0xff]
    %v114 = vld [vmem:[#allocation2 + $0x18] sm:$0xff]
    %115 = vadd.xlane.f32.xlu0 %v111
    %v116 = vpop.xlane.xlu0 %115
    %117 = vadd.xlane.f32.xlu0 %v112
    %v118 = vpop.xlane.xlu0 %117
    %119 = vadd.xlane.f32.xlu0 %v113
    %v120 = vpop.xlane.xlu0 %119
    %121 = vadd.xlane.f32.xlu0 %v114
    %v122 = vpop.xlane.xlu0 %121
    %v123 = vrcp.pop 128.0
    %v124 = vmul.f32 %v116, %v123
    %v125 = vmul.f32 %v118, %v123
    %v126 = vmul.f32 %v120, %v123
    %v127 = vmul.f32 %v122, %v123
    %v128 = vsub.f32 %v111, %v124
    %v129 = vsub.f32 %v112, %v125
    %v130 = vsub.f32 %v113, %v126
    %v131 = vsub.f32 %v114, %v127
    %v132 = vmul.f32 %v128, %v128
    %v133 = vmul.f32 %v129, %v129
    %v134 = vmul.f32 %v130, %v130
    %v135 = vmul.f32 %v131, %v131
    %136 = vadd.xlane.f32.xlu0 %v132
    %v137 = vpop.xlane.xlu0 %136
    %138 = vadd.xlane.f32.xlu0 %v133
    %v139 = vpop.xlane.xlu0 %138
    %140 = vadd.xlane.f32.xlu0 %v134
    %v141 = vpop.xlane.xlu0 %140
    %142 = vadd.xlane.f32.xlu0 %v135
    %v143 = vpop.xlane.xlu0 %142
    %v144 = vmul.f32 %v137, %v123
    %v145 = vmul.f32 %v139, %v123
    %v146 = vmul.f32 %v141, %v123
    %v147 = vmul.f32 %v143, %v123
    %v148 = vadd.f32 %v144, 1e-06
    %v149 = vadd.f32 %v145, 1e-06
    %v150 = vadd.f32 %v146, 1e-06
    %v151 = vadd.f32 %v147, 1e-06
    %v152 = vrsqrt.pop %v148
    %v153 = vrsqrt.pop %v149
    %v154 = vrsqrt.pop %v150
    %v155 = vrsqrt.pop %v151
    %v156 = vmul.f32 %v128, %v152
    %v157 = vmul.f32 %v129, %v153
    %v158 = vmul.f32 %v130, %v154
    %v159 = vmul.f32 %v131, %v155
    %v160 = vld [vmem:[%s1] sm:$0x1]
    %v162 = vlaneseq
    %v163 = vshrl.u32 %v162, 7
    %v164 = vsub.s32 0, %v163
    %v165 = vrot.slane %v160, %v164
    %v167 = vmul.f32 %v156, %v165
    %v168 = vmul.f32 %v157, %v165
    %v169 = vmul.f32 %v158, %v165
    %v170 = vmul.f32 %v159, %v165
    %v171 = vld [vmem:[%s2] sm:$0x1]
    %v173 = vlaneseq
    %v174 = vshrl.u32 %v173, 7
    %v175 = vsub.s32 0, %v174
    %v176 = vrot.slane %v171, %v175
    %v178 = vadd.f32 %v167, %v176
    %v179 = vadd.f32 %v168, %v176
    %v180 = vadd.f32 %v169, %v176
    %v181 = vadd.f32 %v170, %v176
    %v182 = vpack.c.bf16 %v179, %v178
    %v183 = vpack.c.bf16 %v181, %v180
    %v184 = vld [vmem:[#allocation5] sm:$0xff]
    %v185 = vld [vmem:[#allocation5 + $0x8] sm:$0xff]
    %v186 = vld [vmem:[#allocation5 + $0x10] sm:$0xff]
    %v187 = vld [vmem:[#allocation5 + $0x18] sm:$0xff]
    %v188 = vld [vmem:[#allocation5 + $0x20] sm:$0xff]
    %v189 = vld [vmem:[#allocation5 + $0x28] sm:$0xff]
    %v190 = vld [vmem:[#allocation5 + $0x30] sm:$0xff]
    %v191 = vld [vmem:[#allocation5 + $0x38] sm:$0xff]
    %v192 = vld [vmem:[#allocation5 + $0x40] sm:$0xff]
    %v193 = vld [vmem:[#allocation5 + $0x48] sm:$0xff]
    %v194 = vld [vmem:[#allocation5 + $0x50] sm:$0xff]
    %v195 = vld [vmem:[#allocation5 + $0x58] sm:$0xff]
    %v196 = vld [vmem:[#allocation5 + $0x60] sm:$0xff]
    %v197 = vld [vmem:[#allocation5 + $0x68] sm:$0xff]
    %v198 = vld [vmem:[#allocation5 + $0x70] sm:$0xff]
    %v199 = vld [vmem:[#allocation5 + $0x78] sm:$0xff]
    %v200 = vld [vmem:[#allocation5 + $0x80] sm:$0xff]
    %v201 = vld [vmem:[#allocation5 + $0x88] sm:$0xff]
    %v202 = vld [vmem:[#allocation5 + $0x90] sm:$0xff]
    %v203 = vld [vmem:[#allocation5 + $0x98] sm:$0xff]
    %v204 = vld [vmem:[#allocation5 + $0xa0] sm:$0xff]
    %v205 = vld [vmem:[#allocation5 + $0xa8] sm:$0xff]
    %v206 = vld [vmem:[#allocation5 + $0xb0] sm:$0xff]
    %v207 = vld [vmem:[#allocation5 + $0xb8] sm:$0xff]
    %v208 = vld [vmem:[#allocation5 + $0xc0] sm:$0xff]
    %v209 = vld [vmem:[#allocation5 + $0xc8] sm:$0xff]
    %v210 = vld [vmem:[#allocation5 + $0xd0] sm:$0xff]
    %v211 = vld [vmem:[#allocation5 + $0xd8] sm:$0xff]
    %v212 = vld [vmem:[#allocation5 + $0xe0] sm:$0xff]
    %v213 = vld [vmem:[#allocation5 + $0xe8] sm:$0xff]
    %v214 = vld [vmem:[#allocation5 + $0xf0] sm:$0xff]
    %v215 = vld [vmem:[#allocation5 + $0xf8] sm:$0xff]
    %v216 = vld [vmem:[#allocation5 + $0x100] sm:$0xff]
    %v217 = vld [vmem:[#allocation5 + $0x108] sm:$0xff]
    %v218 = vld [vmem:[#allocation5 + $0x110] sm:$0xff]
    %v219 = vld [vmem:[#allocation5 + $0x118] sm:$0xff]
    %v220 = vld [vmem:[#allocation5 + $0x120] sm:$0xff]
    %v221 = vld [vmem:[#allocation5 + $0x128] sm:$0xff]
    %v222 = vld [vmem:[#allocation5 + $0x130] sm:$0xff]
    %v223 = vld [vmem:[#allocation5 + $0x138] sm:$0xff]
    %v224 = vld [vmem:[#allocation5 + $0x140] sm:$0xff]
    %v225 = vld [vmem:[#allocation5 + $0x148] sm:$0xff]
    %v226 = vld [vmem:[#allocation5 + $0x150] sm:$0xff]
    %v227 = vld [vmem:[#allocation5 + $0x158] sm:$0xff]
    %v228 = vld [vmem:[#allocation5 + $0x160] sm:$0xff]
    %v229 = vld [vmem:[#allocation5 + $0x168] sm:$0xff]
    %v230 = vld [vmem:[#allocation5 + $0x170] sm:$0xff]
    %v231 = vld [vmem:[#allocation5 + $0x178] sm:$0xff]
    %v232 = vpack.c.bf16 %v187, %v184
    %v233 = vpack.c.bf16 %v188, %v185
    %v234 = vpack.c.bf16 %v189, %v186
    %v235 = vpack.c.bf16 %v193, %v190
    %v236 = vpack.c.bf16 %v194, %v191
    %v237 = vpack.c.bf16 %v195, %v192
    %v238 = vpack.c.bf16 %v199, %v196
    %v239 = vpack.c.bf16 %v200, %v197
    %v240 = vpack.c.bf16 %v201, %v198
    %v241 = vpack.c.bf16 %v205, %v202
    %v242 = vpack.c.bf16 %v206, %v203
    %v243 = vpack.c.bf16 %v207, %v204
    %v244 = vpack.c.bf16 %v211, %v208
    %v245 = vpack.c.bf16 %v212, %v209
    %v246 = vpack.c.bf16 %v213, %v210
    %v247 = vpack.c.bf16 %v217, %v214
    %v248 = vpack.c.bf16 %v218, %v215
    %v249 = vpack.c.bf16 %v219, %v216
    %v250 = vpack.c.bf16 %v223, %v220
    %v251 = vpack.c.bf16 %v224, %v221
    %v252 = vpack.c.bf16 %v225, %v222
    %v253 = vpack.c.bf16 %v229, %v226
    %v254 = vpack.c.bf16 %v230, %v227
    %v255 = vpack.c.bf16 %v231, %v228
    %256 = vmatprep.subr.bf16.mxu0 %v233
    %257 = vmatpush1.bf16.msra.mxu0 %v232
    %258 = vmatprep.subr.bf16.mxu0 %v236
    %259 = vmatpush1.bf16.msra.mxu0 %v235
    %260 = vmatprep.subr.bf16.mxu0 %v239
    %261 = vmatpush1.bf16.msra.mxu0 %v238
    %262 = vmatprep.subr.bf16.mxu0 %v242
    %263 = vmatpush1.bf16.msra.mxu0 %v241
    %264 = vmatprep.subr.bf16.mxu0 %v245
    %265 = vmatpush1.bf16.msra.mxu0 %v244
    %266 = vmatprep.subr.bf16.mxu0 %v248
    %267 = vmatpush1.bf16.msra.mxu0 %v247
    %268 = vmatprep.subr.bf16.mxu0 %v251
    %269 = vmatpush1.bf16.msra.mxu0 %v250
    %270 = vmatprep.subr.bf16.mxu0 %v254
    %271 = vmatpush1.bf16.msra.mxu0 %v253
    %272 = vmatprep.subr.bf16.mxu0 0
    %273 = vmatpush1.bf16.msra.mxu0 0
    %274 = vmatprep.subr.bf16.mxu0 0
    %275 = vmatpush1.bf16.msra.mxu0 0
    %276 = vmatprep.subr.bf16.mxu0 0
    %277 = vmatpush1.bf16.msra.mxu0 0
    %278 = vmatprep.subr.bf16.mxu0 0
    %279 = vmatpush1.bf16.msra.mxu0 0
    %280 = vmatprep.subr.bf16.mxu0 0
    %281 = vmatpush1.bf16.msra.mxu0 0
    %282 = vmatprep.subr.bf16.mxu0 0
    %283 = vmatpush1.bf16.msra.mxu0 0
    %284 = vmatprep.subr.bf16.mxu0 0
    %285 = vmatpush1.bf16.msra.mxu0 0
    %286 = vmatprep.subr.bf16.mxu0 0
    %287 = vmatpush1.bf16.msra.mxu0 0
    %288 = vmatprep.mubr.bf16.mxu0 0
    %289 = vmatmul.mubr.bf16.gmra.mrb[0].mxu0 %v182
    %v290 = vpop.f32.mrb[0].mxu0
    %v291 = vadd.f32 0.0, %v290
    %v292 = vpop.f32.mrb[0].mxu0
    %v293 = vadd.f32 0.0, %v292
    %v294 = vpop.f32.mrb[0].mxu0
    %v295 = vadd.f32 0.0, %v294
    %v296 = vpop.f32.mrb[0].mxu0
    %v297 = vadd.f32 0.0, %v296
    %298 = vmatprep.mubr.bf16.mxu0 0
    %299 = vmatmul.mubr.bf16.gmra.mrb[0].mxu0 %v183
    %v300 = vpop.f32.mrb[0].mxu0
    %v301 = vadd.f32 0.0, %v300
    %v302 = vpop.f32.mrb[0].mxu0
    %v303 = vadd.f32 0.0, %v302
    %v304 = vpop.f32.mrb[0].mxu0
    %v305 = vadd.f32 0.0, %v304
    %v306 = vpop.f32.mrb[0].mxu0
    %v307 = vadd.f32 0.0, %v306
    %308 = vdwg.mxu0
    %309 = vmatprep.subr.bf16.mxu0 0
    %310 = vmatpush1.bf16.msra.mxu0 %v234
    %311 = vmatprep.subr.bf16.mxu0 0
    %312 = vmatpush1.bf16.msra.mxu0 %v237
    %313 = vmatprep.subr.bf16.mxu0 0
    %314 = vmatpush1.bf16.msra.mxu0 %v240
    %315 = vmatprep.subr.bf16.mxu0 0
    %316 = vmatpush1.bf16.msra.mxu0 %v243
    %317 = vmatprep.subr.bf16.mxu0 0
    %318 = vmatpush1.bf16.msra.mxu0 %v246
    %319 = vmatprep.subr.bf16.mxu0 0
    %320 = vmatpush1.bf16.msra.mxu0 %v249
    %321 = vmatprep.subr.bf16.mxu0 0
    %322 = vmatpush1.bf16.msra.mxu0 %v252
    %323 = vmatprep.subr.bf16.mxu0 0
    %324 = vmatpush1.bf16.msra.mxu0 %v255
    %325 = vmatprep.subr.bf16.mxu0 0
    %326 = vmatpush1.bf16.msra.mxu0 0
    %327 = vmatprep.subr.bf16.mxu0 0
    %328 = vmatpush1.bf16.msra.mxu0 0
    %329 = vmatprep.subr.bf16.mxu0 0
    %330 = vmatpush1.bf16.msra.mxu0 0
    %331 = vmatprep.subr.bf16.mxu0 0
    %332 = vmatpush1.bf16.msra.mxu0 0
    %333 = vmatprep.subr.bf16.mxu0 0
    %334 = vmatpush1.bf16.msra.mxu0 0
    %335 = vmatprep.subr.bf16.mxu0 0
    %336 = vmatpush1.bf16.msra.mxu0 0
    %337 = vmatprep.subr.bf16.mxu0 0
    %338 = vmatpush1.bf16.msra.mxu0 0
    %339 = vmatprep.subr.bf16.mxu0 0
    %340 = vmatpush1.bf16.msra.mxu0 0
    %341 = vmatprep.mubr.bf16.mxu0 0
    %342 = vmatmul.mubr.bf16.gmra.mrb[0].mxu0 %v182
    %v343 = vpop.f32.mrb[0].mxu0
    %v344 = vadd.f32 0.0, %v343
    %v345 = vpop.f32.mrb[0].mxu0
    %v346 = vpop.f32.mrb[0].mxu0
    %v347 = vadd.f32 0.0, %v346
    %v348 = vpop.f32.mrb[0].mxu0
    %349 = vmatprep.mubr.bf16.mxu0 0
    %350 = vmatmul.mubr.bf16.gmra.mrb[0].mxu0 %v183
    %v351 = vpop.f32.mrb[0].mxu0
    %v352 = vadd.f32 0.0, %v351
    %v353 = vpop.f32.mrb[0].mxu0
    %v354 = vpop.f32.mrb[0].mxu0
    %v355 = vadd.f32 0.0, %v354
    %v356 = vpop.f32.mrb[0].mxu0
    %357 = vdwg.mxu0
    %v358 = vpack.c.bf16 %v295, %v291
    %v359 = vpack.c.bf16 %v297, %v293
    %v360 = vpack.c.bf16 %v347, %v344
    %v361 = vpack.c.bf16 %v305, %v301
    %v362 = vpack.c.bf16 %v307, %v303
    %v363 = vpack.c.bf16 %v355, %v352
    %v364 = vlaneseq
    %v365 = vshrl.u32 %v364, 7
    %v366 = vadd.s32 %v365, 8
    %v367 = vlaneseq
    %v368 = vand.u32 %v367, 127
    %vm369 = vcmp.ge.s32.totalorder %v365, %v368
    %vm370 = vcmp.ge.s32.totalorder %v366, %v368
    %v371 = vsel %vm369, 0.0, -1e+30
    %v372 = vsel %vm370, 0.0, -1e+30
    %v373 = vld [vmem:[#allocation7] sm:$0xff]
    %v374 = vld [vmem:[#allocation7 + $0x8] sm:$0xff]
    %v375 = vld [vmem:[#allocation7 + $0x10] sm:$0xff]
    %v376 = vld [vmem:[#allocation7 + $0x18] sm:$0xff]
    %v377 = vld [vmem:[#allocation7 + $0x20] sm:$0xff]
    %v378 = vld [vmem:[#allocation7 + $0x28] sm:$0xff]
    %v379 = vld [vmem:[#allocation7 + $0x30] sm:$0xff]
    %v380 = vld [vmem:[#allocation7 + $0x38] sm:$0xff]
    %v381 = vld [vmem:[#allocation7 + $0x40] sm:$0xff]
    %v382 = vld [vmem:[#allocation7 + $0x48] sm:$0xff]
    %v383 = vld [vmem:[#allocation7 + $0x50] sm:$0xff]
    %v384 = vld [vmem:[#allocation7 + $0x58] sm:$0xff]
    %v385 = vld [vmem:[#allocation7 + $0x60] sm:$0xff]
    %v386 = vld [vmem:[#allocation7 + $0x68] sm:$0xff]
    %v387 = vld [vmem:[#allocation7 + $0x70] sm:$0xff]
    %v388 = vld [vmem:[#allocation7 + $0x78] sm:$0xff]
    %v389 = vpack.c.bf16 %v374, %v373
    %v390 = vpack.c.bf16 %v376, %v375
    %v391 = vpack.c.bf16 %v378, %v377
    %v392 = vpack.c.bf16 %v380, %v379
    %v393 = vpack.c.bf16 %v382, %v381
    %v394 = vpack.c.bf16 %v384, %v383
    %v395 = vpack.c.bf16 %v386, %v385
    %v396 = vpack.c.bf16 %v388, %v387
    %vm397 = vcmask 261120
    %v399 = vsel %vm397, %v358, 0
    %v402 = vsel %vm397, %v359, 0
    %404 = vmatprep.subr.bf16.mxu0 0
    %405 = vmatpush1.bf16.xpose.msra.mxu0 %v402
    %406 = vmatprep.subr.bf16.mxu0 0
    %407 = vmatpush1.bf16.xpose.msra.mxu0 0
    %408 = vmatprep.subr.bf16.mxu0 0
    %409 = vmatpush1.bf16.xpose.msra.mxu0 0
    %410 = vmatprep.subr.bf16.mxu0 0
    %411 = vmatpush1.bf16.xpose.msra.mxu0 0
    %412 = vmatprep.subr.bf16.mxu0 0
    %413 = vmatpush1.bf16.xpose.msra.mxu0 0
    %414 = vmatprep.subr.bf16.mxu0 0
    %415 = vmatpush1.bf16.xpose.msra.mxu0 0
    %416 = vmatprep.subr.bf16.mxu0 0
    %417 = vmatpush1.bf16.xpose.msra.mxu0 0
    %418 = vmatprep.subr.bf16.mxu0 0
    %419 = vmatpush1.bf16.xpose.msra.mxu0 0
    %420 = vmatprep.subr.bf16.mxu0 0
    %421 = vmatpush1.bf16.xpose.msra.mxu0 0
    %422 = vmatprep.subr.bf16.mxu0 0
    %423 = vmatpush1.bf16.xpose.msra.mxu0 0
    %424 = vmatprep.subr.bf16.mxu0 0
    %425 = vmatpush1.bf16.xpose.msra.mxu0 0
    %426 = vmatprep.subr.bf16.mxu0 0
    %427 = vmatpush1.bf16.xpose.msra.mxu0 0
    %428 = vmatprep.subr.bf16.mxu0 0
    %429 = vmatpush1.bf16.xpose.msra.mxu0 0
    %430 = vmatprep.subr.bf16.mxu0 0
    %431 = vmatpush1.bf16.xpose.msra.mxu0 0
    %432 = vmatprep.subr.bf16.mxu0 0
    %433 = vmatpush1.bf16.xpose.msra.mxu0 0
    %434 = vmatprep.subr.bf16.mxu0 0
    %435 = vmatpush1.bf16.xpose.msra.mxu0 0
    %436 = vmatprep.mubr.bf16.mxu0 0
    %437 = vmatmul.mubr.bf16.gmra.mrb[0].mxu0 %v399
    %v438 = vpop.f32.mrb[0].mxu0
    %v439 = vadd.f32 0.0, %v438
    %v440 = vpop.f32.mrb[0].mxu0
    %v441 = vpop.f32.mrb[0].mxu0
    %v442 = vadd.f32 0.0, %v441
    %v443 = vpop.f32.mrb[0].mxu0
    %444 = vdwg.mxu0
    %v446 = vsel %vm397, %v361, 0
    %v449 = vsel %vm397, %v362, 0
    %451 = vmatprep.subr.bf16.mxu0 0
    %452 = vmatpush1.bf16.xpose.msra.mxu0 %v449
    %453 = vmatprep.subr.bf16.mxu0 0
    %454 = vmatpush1.bf16.xpose.msra.mxu0 0
    %455 = vmatprep.subr.bf16.mxu0 0
    %456 = vmatpush1.bf16.xpose.msra.mxu0 0
    %457 = vmatprep.subr.bf16.mxu0 0
    %458 = vmatpush1.bf16.xpose.msra.mxu0 0
    %459 = vmatprep.subr.bf16.mxu0 0
    %460 = vmatpush1.bf16.xpose.msra.mxu0 0
    %461 = vmatprep.subr.bf16.mxu0 0
    %462 = vmatpush1.bf16.xpose.msra.mxu0 0
    %463 = vmatprep.subr.bf16.mxu0 0
    %464 = vmatpush1.bf16.xpose.msra.mxu0 0
    %465 = vmatprep.subr.bf16.mxu0 0
    %466 = vmatpush1.bf16.xpose.msra.mxu0 0
    %467 = vmatprep.subr.bf16.mxu0 0
    %468 = vmatpush1.bf16.xpose.msra.mxu0 0
    %469 = vmatprep.subr.bf16.mxu0 0
    %470 = vmatpush1.bf16.xpose.msra.mxu0 0
    %471 = vmatprep.subr.bf16.mxu0 0
    %472 = vmatpush1.bf16.xpose.msra.mxu0 0
    %473 = vmatprep.subr.bf16.mxu0 0
    %474 = vmatpush1.bf16.xpose.msra.mxu0 0
    %475 = vmatprep.subr.bf16.mxu0 0
    %476 = vmatpush1.bf16.xpose.msra.mxu0 0
    %477 = vmatprep.subr.bf16.mxu0 0
    %478 = vmatpush1.bf16.xpose.msra.mxu0 0
    %479 = vmatprep.subr.bf16.mxu0 0
    %480 = vmatpush1.bf16.xpose.msra.mxu0 0
    %481 = vmatprep.subr.bf16.mxu0 0
    %482 = vmatpush1.bf16.xpose.msra.mxu0 0
    %483 = vmatprep.mubr.bf16.mxu0 0
    %484 = vmatmul.mubr.bf16.gmra.mrb[0].mxu0 %v446
    %v485 = vpop.f32.mrb[0].mxu0
    %v486 = vadd.f32 0.0, %v485
    %v487 = vpop.f32.mrb[0].mxu0
    %v488 = vpop.f32.mrb[0].mxu0
    %v489 = vadd.f32 0.0, %v488
    %v490 = vpop.f32.mrb[0].mxu0
    %491 = vdwg.mxu0
    %v492 = vmul.f32 %v439, 0.088388346
    %v493 = vmul.f32 %v442, 0.088388346
    %v494 = vmul.f32 %v486, 0.088388346
    %v495 = vmul.f32 %v489, 0.088388346
    %v496 = vadd.f32 %v492, %v371
    %v497 = vadd.f32 %v493, %v372
    %v498 = vadd.f32 %v494, %v371
    %v499 = vadd.f32 %v495, %v372
    %vm500 = vcmask 130048
    %v501 = vsel %vm500, %v496, -inf
    %502 = vmax.xlane.f32.xlu0 %v501
    %v503 = vpop.xlane.xlu0 %502
    %v504 = vsel %vm500, %v497, -inf
    %505 = vmax.xlane.f32.xlu0 %v504
    %v506 = vpop.xlane.xlu0 %505
    %v507 = vsel %vm500, %v498, -inf
    %508 = vmax.xlane.f32.xlu0 %v507
    %v509 = vpop.xlane.xlu0 %508
    %v510 = vsel %vm500, %v499, -inf
    %511 = vmax.xlane.f32.xlu0 %v510
    %v512 = vpop.xlane.xlu0 %511
    %v513 = vsub.f32 %v496, %v503
    %v514 = vsub.f32 %v497, %v506
    %v515 = vsub.f32 %v498, %v509
    %v516 = vsub.f32 %v499, %v512
    %v517 = vmul.f32 %v513, 1.442695
    %v518 = vpow.pop %v517
    %v519 = vmul.f32 %v514, 1.442695
    %v520 = vpow.pop %v519
    %v521 = vmul.f32 %v515, 1.442695
    %v522 = vpow.pop %v521
    %v523 = vmul.f32 %v516, 1.442695
    %v524 = vpow.pop %v523
    %v525 = vsel %vm500, %v518, 0.0
    %526 = vadd.xlane.f32.xlu0 %v525
    %v527 = vpop.xlane.xlu0 %526
    %v528 = vsel %vm500, %v520, 0.0
    %529 = vadd.xlane.f32.xlu0 %v528
    %v530 = vpop.xlane.xlu0 %529
    %v531 = vsel %vm500, %v522, 0.0
    %532 = vadd.xlane.f32.xlu0 %v531
    %v533 = vpop.xlane.xlu0 %532
    %v534 = vsel %vm500, %v524, 0.0
    %535 = vadd.xlane.f32.xlu0 %v534
    %v536 = vpop.xlane.xlu0 %535
    %v537 = vrcp.pop %v527
    %v538 = vrcp.pop %v530
    %v539 = vrcp.pop %v533
    %v540 = vrcp.pop %v536
    %v541 = vmul.f32 %v518, %v537
    %v542 = vmul.f32 %v520, %v538
    %v543 = vmul.f32 %v522, %v539
    %v544 = vmul.f32 %v524, %v540
    %v545 = vpack.c.bf16 %v542, %v541
    %v546 = vpack.c.bf16 %v544, %v543
    %v548 = vsel %vm500, %v545, 0
    %550 = vmatprep.subr.bf16.mxu0 0
    %551 = vmatpush1.bf16.msra.mxu0 %v360
    %552 = vmatprep.subr.bf16.mxu0 0
    %553 = vmatpush1.bf16.msra.mxu0 0
    %554 = vmatprep.subr.bf16.mxu0 0
    %555 = vmatpush1.bf16.msra.mxu0 0
    %556 = vmatprep.subr.bf16.mxu0 0
    %557 = vmatpush1.bf16.msra.mxu0 0
    %558 = vmatprep.subr.bf16.mxu0 0
    %559 = vmatpush1.bf16.msra.mxu0 0
    %560 = vmatprep.subr.bf16.mxu0 0
    %561 = vmatpush1.bf16.msra.mxu0 0
    %562 = vmatprep.subr.bf16.mxu0 0
    %563 = vmatpush1.bf16.msra.mxu0 0
    %564 = vmatprep.subr.bf16.mxu0 0
    %565 = vmatpush1.bf16.msra.mxu0 0
    %566 = vmatprep.subr.bf16.mxu0 0
    %567 = vmatpush1.bf16.msra.mxu0 0
    %568 = vmatprep.subr.bf16.mxu0 0
    %569 = vmatpush1.bf16.msra.mxu0 0
    %570 = vmatprep.subr.bf16.mxu0 0
    %571 = vmatpush1.bf16.msra.mxu0 0
    %572 = vmatprep.subr.bf16.mxu0 0
    %573 = vmatpush1.bf16.msra.mxu0 0
    %574 = vmatprep.subr.bf16.mxu0 0
    %575 = vmatpush1.bf16.msra.mxu0 0
    %576 = vmatprep.subr.bf16.mxu0 0
    %577 = vmatpush1.bf16.msra.mxu0 0
    %578 = vmatprep.subr.bf16.mxu0 0
    %579 = vmatpush1.bf16.msra.mxu0 0
    %580 = vmatprep.subr.bf16.mxu0 0
    %581 = vmatpush1.bf16.msra.mxu0 0
    %582 = vmatprep.mubr.bf16.mxu0 0
    %583 = vmatmul.mubr.bf16.gmra.mrb[0].mxu0 %v548
    %v584 = vpop.f32.mrb[0].mxu0
    %v585 = vadd.f32 0.0, %v584
    %v586 = vpop.f32.mrb[0].mxu0
    %v587 = vpop.f32.mrb[0].mxu0
    %v588 = vadd.f32 0.0, %v587
    %v589 = vpop.f32.mrb[0].mxu0
    %590 = vdwg.mxu0
    %v592 = vsel %vm500, %v546, 0
    %594 = vmatprep.subr.bf16.mxu0 0
    %595 = vmatpush1.bf16.msra.mxu0 %v363
    %596 = vmatprep.subr.bf16.mxu0 0
    %597 = vmatpush1.bf16.msra.mxu0 0
    %598 = vmatprep.subr.bf16.mxu0 0
    %599 = vmatpush1.bf16.msra.mxu0 0
    %600 = vmatprep.subr.bf16.mxu0 0
    %601 = vmatpush1.bf16.msra.mxu0 0
    %602 = vmatprep.subr.bf16.mxu0 0
    %603 = vmatpush1.bf16.msra.mxu0 0
    %604 = vmatprep.subr.bf16.mxu0 0
    %605 = vmatpush1.bf16.msra.mxu0 0
    %606 = vmatprep.subr.bf16.mxu0 0
    %607 = vmatpush1.bf16.msra.mxu0 0
    %608 = vmatprep.subr.bf16.mxu0 0
    %609 = vmatpush1.bf16.msra.mxu0 0
    %610 = vmatprep.subr.bf16.mxu0 0
    %611 = vmatpush1.bf16.msra.mxu0 0
    %612 = vmatprep.subr.bf16.mxu0 0
    %613 = vmatpush1.bf16.msra.mxu0 0
    %614 = vmatprep.subr.bf16.mxu0 0
    %615 = vmatpush1.bf16.msra.mxu0 0
    %616 = vmatprep.subr.bf16.mxu0 0
    %617 = vmatpush1.bf16.msra.mxu0 0
    %618 = vmatprep.subr.bf16.mxu0 0
    %619 = vmatpush1.bf16.msra.mxu0 0
    %620 = vmatprep.subr.bf16.mxu0 0
    %621 = vmatpush1.bf16.msra.mxu0 0
    %622 = vmatprep.subr.bf16.mxu0 0
    %623 = vmatpush1.bf16.msra.mxu0 0
    %624 = vmatprep.subr.bf16.mxu0 0
    %625 = vmatpush1.bf16.msra.mxu0 0
    %626 = vmatprep.mubr.bf16.mxu0 0
    %627 = vmatmul.mubr.bf16.gmra.mrb[0].mxu0 %v592
    %v628 = vpop.f32.mrb[0].mxu0
    %v629 = vadd.f32 0.0, %v628
    %v630 = vpop.f32.mrb[0].mxu0
    %v631 = vpop.f32.mrb[0].mxu0
    %v632 = vadd.f32 0.0, %v631
    %v633 = vpop.f32.mrb[0].mxu0
    %634 = vdwg.mxu0
    %v635 = vpack.c.bf16 %v588, %v585
    %v636 = vpack.c.bf16 %v632, %v629
    %638 = vrot.lane.b32.xlu0 %v358, 96
    %v639 = vpop.permute.xlu0 %638
    %641 = vrot.lane.b32.xlu0 %v359, 96
    %v642 = vpop.permute.xlu0 %641
    %v644 = vsel %vm397, %v639, 0
    %v647 = vsel %vm397, %v642, 0
    %649 = vmatprep.subr.bf16.mxu0 0
    %650 = vmatpush1.bf16.xpose.msra.mxu0 %v647
    %651 = vmatprep.subr.bf16.mxu0 0
    %652 = vmatpush1.bf16.xpose.msra.mxu0 0
    %653 = vmatprep.subr.bf16.mxu0 0
    %654 = vmatpush1.bf16.xpose.msra.mxu0 0
    %655 = vmatprep.subr.bf16.mxu0 0
    %656 = vmatpush1.bf16.xpose.msra.mxu0 0
    %657 = vmatprep.subr.bf16.mxu0 0
    %658 = vmatpush1.bf16.xpose.msra.mxu0 0
    %659 = vmatprep.subr.bf16.mxu0 0
    %660 = vmatpush1.bf16.xpose.msra.mxu0 0
    %661 = vmatprep.subr.bf16.mxu0 0
    %662 = vmatpush1.bf16.xpose.msra.mxu0 0
    %663 = vmatprep.subr.bf16.mxu0 0
    %664 = vmatpush1.bf16.xpose.msra.mxu0 0
    %665 = vmatprep.subr.bf16.mxu0 0
    %666 = vmatpush1.bf16.xpose.msra.mxu0 0
    %667 = vmatprep.subr.bf16.mxu0 0
    %668 = vmatpush1.bf16.xpose.msra.mxu0 0
    %669 = vmatprep.subr.bf16.mxu0 0
    %670 = vmatpush1.bf16.xpose.msra.mxu0 0
    %671 = vmatprep.subr.bf16.mxu0 0
    %672 = vmatpush1.bf16.xpose.msra.mxu0 0
    %673 = vmatprep.subr.bf16.mxu0 0
    %674 = vmatpush1.bf16.xpose.msra.mxu0 0
    %675 = vmatprep.subr.bf16.mxu0 0
    %676 = vmatpush1.bf16.xpose.msra.mxu0 0
    %677 = vmatprep.subr.bf16.mxu0 0
    %678 = vmatpush1.bf16.xpose.msra.mxu0 0
    %679 = vmatprep.subr.bf16.mxu0 0
    %680 = vmatpush1.bf16.xpose.msra.mxu0 0
    %681 = vmatprep.mubr.bf16.mxu0 0
    %682 = vmatmul.mubr.bf16.gmra.mrb[0].mxu0 %v644
    %v683 = vpop.f32.mrb[0].mxu0
    %v684 = vadd.f32 0.0, %v683
    %v685 = vpop.f32.mrb[0].mxu0
    %v686 = vpop.f32.mrb[0].mxu0
    %v687 = vadd.f32 0.0, %v686
    %v688 = vpop.f32.mrb[0].mxu0
    %689 = vdwg.mxu0
    %691 = vrot.lane.b32.xlu0 %v361, 96
    %v692 = vpop.permute.xlu0 %691
    %694 = vrot.lane.b32.xlu0 %v362, 96
    %v695 = vpop.permute.xlu0 %694
    %v697 = vsel %vm397, %v692, 0
    %v700 = vsel %vm397, %v695, 0
    %702 = vmatprep.subr.bf16.mxu0 0
    %703 = vmatpush1.bf16.xpose.msra.mxu0 %v700
    %704 = vmatprep.subr.bf16.mxu0 0
    %705 = vmatpush1.bf16.xpose.msra.mxu0 0
    %706 = vmatprep.subr.bf16.mxu0 0
    %707 = vmatpush1.bf16.xpose.msra.mxu0 0
    %708 = vmatprep.subr.bf16.mxu0 0
    %709 = vmatpush1.bf16.xpose.msra.mxu0 0
    %710 = vmatprep.subr.bf16.mxu0 0
    %711 = vmatpush1.bf16.xpose.msra.mxu0 0
    %712 = vmatprep.subr.bf16.mxu0 0
    %713 = vmatpush1.bf16.xpose.msra.mxu0 0
    %714 = vmatprep.subr.bf16.mxu0 0
    %715 = vmatpush1.bf16.xpose.msra.mxu0 0
    %716 = vmatprep.subr.bf16.mxu0 0
    %717 = vmatpush1.bf16.xpose.msra.mxu0 0
    %718 = vmatprep.subr.bf16.mxu0 0
    %719 = vmatpush1.bf16.xpose.msra.mxu0 0
    %720 = vmatprep.subr.bf16.mxu0 0
    %721 = vmatpush1.bf16.xpose.msra.mxu0 0
    %722 = vmatprep.subr.bf16.mxu0 0
    %723 = vmatpush1.bf16.xpose.msra.mxu0 0
    %724 = vmatprep.subr.bf16.mxu0 0
    %725 = vmatpush1.bf16.xpose.msra.mxu0 0
    %726 = vmatprep.subr.bf16.mxu0 0
    %727 = vmatpush1.bf16.xpose.msra.mxu0 0
    %728 = vmatprep.subr.bf16.mxu0 0
    %729 = vmatpush1.bf16.xpose.msra.mxu0 0
    %730 = vmatprep.subr.bf16.mxu0 0
    %731 = vmatpush1.bf16.xpose.msra.mxu0 0
    %732 = vmatprep.subr.bf16.mxu0 0
    %733 = vmatpush1.bf16.xpose.msra.mxu0 0
    %734 = vmatprep.mubr.bf16.mxu0 0
    %735 = vmatmul.mubr.bf16.gmra.mrb[0].mxu0 %v697
    %v736 = vpop.f32.mrb[0].mxu0
    %v737 = vadd.f32 0.0, %v736
    %v738 = vpop.f32.mrb[0].mxu0
    %v739 = vpop.f32.mrb[0].mxu0
    %v740 = vadd.f32 0.0, %v739
    %v741 = vpop.f32.mrb[0].mxu0
    %742 = vdwg.mxu0
    %v743 = vmul.f32 %v684, 0.088388346
    %v744 = vmul.f32 %v687, 0.088388346
    %v745 = vmul.f32 %v737, 0.088388346
    %v746 = vmul.f32 %v740, 0.088388346
    %v747 = vadd.f32 %v743, %v371
    %v748 = vadd.f32 %v744, %v372
    %v749 = vadd.f32 %v745, %v371
    %v750 = vadd.f32 %v746, %v372
    %v751 = vsel %vm500, %v747, -inf
    %752 = vmax.xlane.f32.xlu0 %v751
    %v753 = vpop.xlane.xlu0 %752
    %v754 = vsel %vm500, %v748, -inf
    %755 = vmax.xlane.f32.xlu0 %v754
    %v756 = vpop.xlane.xlu0 %755
    %v757 = vsel %vm500, %v749, -inf
    %758 = vmax.xlane.f32.xlu0 %v757
    %v759 = vpop.xlane.xlu0 %758
    %v760 = vsel %vm500, %v750, -inf
    %761 = vmax.xlane.f32.xlu0 %v760
    %v762 = vpop.xlane.xlu0 %761
    %v763 = vsub.f32 %v747, %v753
    %v764 = vsub.f32 %v748, %v756
    %v765 = vsub.f32 %v749, %v759
    %v766 = vsub.f32 %v750, %v762
    %v767 = vmul.f32 %v763, 1.442695
    %v768 = vpow.pop %v767
    %v769 = vmul.f32 %v764, 1.442695
    %v770 = vpow.pop %v769
    %v771 = vmul.f32 %v765, 1.442695
    %v772 = vpow.pop %v771
    %v773 = vmul.f32 %v766, 1.442695
    %v774 = vpow.pop %v773
    %v775 = vsel %vm500, %v768, 0.0
    %776 = vadd.xlane.f32.xlu0 %v775
    %v777 = vpop.xlane.xlu0 %776
    %v778 = vsel %vm500, %v770, 0.0
    %779 = vadd.xlane.f32.xlu0 %v778
    %v780 = vpop.xlane.xlu0 %779
    %v781 = vsel %vm500, %v772, 0.0
    %782 = vadd.xlane.f32.xlu0 %v781
    %v783 = vpop.xlane.xlu0 %782
    %v784 = vsel %vm500, %v774, 0.0
    %785 = vadd.xlane.f32.xlu0 %v784
    %v786 = vpop.xlane.xlu0 %785
    %v787 = vrcp.pop %v777
    %v788 = vrcp.pop %v780
    %v789 = vrcp.pop %v783
    %v790 = vrcp.pop %v786
    %v791 = vmul.f32 %v768, %v787
    %v792 = vmul.f32 %v770, %v788
    %v793 = vmul.f32 %v772, %v789
    %v794 = vmul.f32 %v774, %v790
    %v795 = vpack.c.bf16 %v792, %v791
    %v796 = vpack.c.bf16 %v794, %v793
    %798 = vrot.lane.b32.xlu0 %v360, 96
    %v799 = vpop.permute.xlu0 %798
    %v802 = vsel %vm500, %v795, 0
    %804 = vmatprep.subr.bf16.mxu0 0
    %805 = vmatpush1.bf16.msra.mxu0 %v799
    %806 = vmatprep.subr.bf16.mxu0 0
    %807 = vmatpush1.bf16.msra.mxu0 0
    %808 = vmatprep.subr.bf16.mxu0 0
    %809 = vmatpush1.bf16.msra.mxu0 0
    %810 = vmatprep.subr.bf16.mxu0 0
    %811 = vmatpush1.bf16.msra.mxu0 0
    %812 = vmatprep.subr.bf16.mxu0 0
    %813 = vmatpush1.bf16.msra.mxu0 0
    %814 = vmatprep.subr.bf16.mxu0 0
    %815 = vmatpush1.bf16.msra.mxu0 0
    %816 = vmatprep.subr.bf16.mxu0 0
    %817 = vmatpush1.bf16.msra.mxu0 0
    %818 = vmatprep.subr.bf16.mxu0 0
    %819 = vmatpush1.bf16.msra.mxu0 0
    %820 = vmatprep.subr.bf16.mxu0 0
    %821 = vmatpush1.bf16.msra.mxu0 0
    %822 = vmatprep.subr.bf16.mxu0 0
    %823 = vmatpush1.bf16.msra.mxu0 0
    %824 = vmatprep.subr.bf16.mxu0 0
    %825 = vmatpush1.bf16.msra.mxu0 0
    %826 = vmatprep.subr.bf16.mxu0 0
    %827 = vmatpush1.bf16.msra.mxu0 0
    %828 = vmatprep.subr.bf16.mxu0 0
    %829 = vmatpush1.bf16.msra.mxu0 0
    %830 = vmatprep.subr.bf16.mxu0 0
    %831 = vmatpush1.bf16.msra.mxu0 0
    %832 = vmatprep.subr.bf16.mxu0 0
    %833 = vmatpush1.bf16.msra.mxu0 0
    %834 = vmatprep.subr.bf16.mxu0 0
    %835 = vmatpush1.bf16.msra.mxu0 0
    %836 = vmatprep.mubr.bf16.mxu0 0
    %837 = vmatmul.mubr.bf16.gmra.mrb[0].mxu0 %v802
    %v838 = vpop.f32.mrb[0].mxu0
    %v839 = vadd.f32 0.0, %v838
    %v840 = vpop.f32.mrb[0].mxu0
    %v841 = vpop.f32.mrb[0].mxu0
    %v842 = vadd.f32 0.0, %v841
    %v843 = vpop.f32.mrb[0].mxu0
    %844 = vdwg.mxu0
    %846 = vrot.lane.b32.xlu0 %v363, 96
    %v847 = vpop.permute.xlu0 %846
    %v850 = vsel %vm500, %v796, 0
    %852 = vmatprep.subr.bf16.mxu0 0
    %853 = vmatpush1.bf16.msra.mxu0 %v847
    %854 = vmatprep.subr.bf16.mxu0 0
    %855 = vmatpush1.bf16.msra.mxu0 0
    %856 = vmatprep.subr.bf16.mxu0 0
    %857 = vmatpush1.bf16.msra.mxu0 0
    %858 = vmatprep.subr.bf16.mxu0 0
    %859 = vmatpush1.bf16.msra.mxu0 0
    %860 = vmatprep.subr.bf16.mxu0 0
    %861 = vmatpush1.bf16.msra.mxu0 0
    %862 = vmatprep.subr.bf16.mxu0 0
    %863 = vmatpush1.bf16.msra.mxu0 0
    %864 = vmatprep.subr.bf16.mxu0 0
    %865 = vmatpush1.bf16.msra.mxu0 0
    %866 = vmatprep.subr.bf16.mxu0 0
    %867 = vmatpush1.bf16.msra.mxu0 0
    %868 = vmatprep.subr.bf16.mxu0 0
    %869 = vmatpush1.bf16.msra.mxu0 0
    %870 = vmatprep.subr.bf16.mxu0 0
    %871 = vmatpush1.bf16.msra.mxu0 0
    %872 = vmatprep.subr.bf16.mxu0 0
    %873 = vmatpush1.bf16.msra.mxu0 0
    %874 = vmatprep.subr.bf16.mxu0 0
    %875 = vmatpush1.bf16.msra.mxu0 0
    %876 = vmatprep.subr.bf16.mxu0 0
    %877 = vmatpush1.bf16.msra.mxu0 0
    %878 = vmatprep.subr.bf16.mxu0 0
    %879 = vmatpush1.bf16.msra.mxu0 0
    %880 = vmatprep.subr.bf16.mxu0 0
    %881 = vmatpush1.bf16.msra.mxu0 0
    %882 = vmatprep.subr.bf16.mxu0 0
    %883 = vmatpush1.bf16.msra.mxu0 0
    %884 = vmatprep.mubr.bf16.mxu0 0
    %885 = vmatmul.mubr.bf16.gmra.mrb[0].mxu0 %v850
    %v886 = vpop.f32.mrb[0].mxu0
    %v887 = vadd.f32 0.0, %v886
    %v888 = vpop.f32.mrb[0].mxu0
    %v889 = vpop.f32.mrb[0].mxu0
    %v890 = vadd.f32 0.0, %v889
    %v891 = vpop.f32.mrb[0].mxu0
    %892 = vdwg.mxu0
    %v893 = vpack.c.bf16 %v842, %v839
    %v894 = vpack.c.bf16 %v890, %v887
    %v896 = vsel %vm397, %v893, 0
    %v899 = vsel %vm397, %v894, 0
    %901 = vmatprep.subr.bf16.mxu0 0
    %902 = vmatpush1.bf16.msra.mxu0 %v391
    %903 = vmatprep.subr.bf16.mxu0 0
    %904 = vmatpush1.bf16.msra.mxu0 %v392
    %905 = vmatprep.subr.bf16.mxu0 0
    %906 = vmatpush1.bf16.msra.mxu0 0
    %907 = vmatprep.subr.bf16.mxu0 0
    %908 = vmatpush1.bf16.msra.mxu0 0
    %909 = vmatprep.subr.bf16.mxu0 0
    %910 = vmatpush1.bf16.msra.mxu0 0
    %911 = vmatprep.subr.bf16.mxu0 0
    %912 = vmatpush1.bf16.msra.mxu0 0
    %913 = vmatprep.subr.bf16.mxu0 0
    %914 = vmatpush1.bf16.msra.mxu0 0
    %915 = vmatprep.subr.bf16.mxu0 0
    %916 = vmatpush1.bf16.msra.mxu0 0
    %917 = vmatprep.subr.bf16.mxu0 0
    %918 = vmatpush1.bf16.msra.mxu0 0
    %919 = vmatprep.subr.bf16.mxu0 0
    %920 = vmatpush1.bf16.msra.mxu0 0
    %921 = vmatprep.subr.bf16.mxu0 0
    %922 = vmatpush1.bf16.msra.mxu0 0
    %923 = vmatprep.subr.bf16.mxu0 0
    %924 = vmatpush1.bf16.msra.mxu0 0
    %925 = vmatprep.subr.bf16.mxu0 0
    %926 = vmatpush1.bf16.msra.mxu0 0
    %927 = vmatprep.subr.bf16.mxu0 0
    %928 = vmatpush1.bf16.msra.mxu0 0
    %929 = vmatprep.subr.bf16.mxu0 0
    %930 = vmatpush1.bf16.msra.mxu0 0
    %931 = vmatprep.subr.bf16.mxu0 0
    %932 = vmatpush1.bf16.msra.mxu0 0
    %933 = vmatprep.mubr.bf16.mxu0 0
    %934 = vmatmul.mubr.bf16.gmra.mrb[0].mxu0 %v896
    %v935 = vpop.f32.mrb[0].mxu0
    %v936 = vadd.f32 0.0, %v935
    %v937 = vpop.f32.mrb[0].mxu0
    %v938 = vpop.f32.mrb[0].mxu0
    %v939 = vadd.f32 0.0, %v938
    %v940 = vpop.f32.mrb[0].mxu0
    %941 = vmatprep.mubr.bf16.mxu0 0
    %942 = vmatmul.mubr.bf16.gmra.mrb[0].mxu0 %v899
    %v943 = vpop.f32.mrb[0].mxu0
    %v944 = vadd.f32 0.0, %v943
    %v945 = vpop.f32.mrb[0].mxu0
    %v946 = vpop.f32.mrb[0].mxu0
    %v947 = vadd.f32 0.0, %v946
    %v948 = vpop.f32.mrb[0].mxu0
    %949 = vdwg.mxu0
    %v951 = vsel %vm397, %v635, 0
    %v954 = vsel %vm397, %v636, 0
    %956 = vmatprep.subr.bf16.mxu0 0
    %957 = vmatpush1.bf16.msra.mxu0 %v389
    %958 = vmatprep.subr.bf16.mxu0 0
    %959 = vmatpush1.bf16.msra.mxu0 %v390
    %960 = vmatprep.subr.bf16.mxu0 0
    %961 = vmatpush1.bf16.msra.mxu0 0
    %962 = vmatprep.subr.bf16.mxu0 0
    %963 = vmatpush1.bf16.msra.mxu0 0
    %964 = vmatprep.subr.bf16.mxu0 0
    %965 = vmatpush1.bf16.msra.mxu0 0
    %966 = vmatprep.subr.bf16.mxu0 0
    %967 = vmatpush1.bf16.msra.mxu0 0
    %968 = vmatprep.subr.bf16.mxu0 0
    %969 = vmatpush1.bf16.msra.mxu0 0
    %970 = vmatprep.subr.bf16.mxu0 0
    %971 = vmatpush1.bf16.msra.mxu0 0
    %972 = vmatprep.subr.bf16.mxu0 0
    %973 = vmatpush1.bf16.msra.mxu0 0
    %974 = vmatprep.subr.bf16.mxu0 0
    %975 = vmatpush1.bf16.msra.mxu0 0
    %976 = vmatprep.subr.bf16.mxu0 0
    %977 = vmatpush1.bf16.msra.mxu0 0
    %978 = vmatprep.subr.bf16.mxu0 0
    %979 = vmatpush1.bf16.msra.mxu0 0
    %980 = vmatprep.subr.bf16.mxu0 0
    %981 = vmatpush1.bf16.msra.mxu0 0
    %982 = vmatprep.subr.bf16.mxu0 0
    %983 = vmatpush1.bf16.msra.mxu0 0
    %984 = vmatprep.subr.bf16.mxu0 0
    %985 = vmatpush1.bf16.msra.mxu0 0
    %986 = vmatprep.subr.bf16.mxu0 0
    %987 = vmatpush1.bf16.msra.mxu0 0
    %988 = vmatprep.mubr.bf16.mxu0 0
    %989 = vmatmul.mubr.bf16.gmra.mrb[0].mxu0 %v951
    %v990 = vpop.f32.mrb[0].mxu0
    %v991 = vadd.f32 %v936, %v990
    %v992 = vpop.f32.mrb[0].mxu0
    %v993 = vpop.f32.mrb[0].mxu0
    %v994 = vadd.f32 %v939, %v993
    %v995 = vpop.f32.mrb[0].mxu0
    %996 = vmatprep.mubr.bf16.mxu0 0
    %997 = vmatmul.mubr.bf16.gmra.mrb[0].mxu0 %v954
    %v998 = vpop.f32.mrb[0].mxu0
    %v999 = vadd.f32 %v944, %v998
    %v1000 = vpop.f32.mrb[0].mxu0
    %v1001 = vpop.f32.mrb[0].mxu0
    %v1002 = vadd.f32 %v947, %v1001
    %v1003 = vpop.f32.mrb[0].mxu0
    %1004 = vdwg.mxu0
    %1005 = vrot.lane.b32.xlu0 %v358, 64
    %v1006 = vpop.permute.xlu0 %1005
    %1007 = vrot.lane.b32.xlu0 %v359, 64
    %v1008 = vpop.permute.xlu0 %1007
    %v1010 = vsel %vm397, %v1006, 0
    %v1013 = vsel %vm397, %v1008, 0
    %1015 = vmatprep.subr.bf16.mxu0 0
    %1016 = vmatpush1.bf16.xpose.msra.mxu0 %v1013
    %1017 = vmatprep.subr.bf16.mxu0 0
    %1018 = vmatpush1.bf16.xpose.msra.mxu0 0
    %1019 = vmatprep.subr.bf16.mxu0 0
    %1020 = vmatpush1.bf16.xpose.msra.mxu0 0
    %1021 = vmatprep.subr.bf16.mxu0 0
    %1022 = vmatpush1.bf16.xpose.msra.mxu0 0
    %1023 = vmatprep.subr.bf16.mxu0 0
    %1024 = vmatpush1.bf16.xpose.msra.mxu0 0
    %1025 = vmatprep.subr.bf16.mxu0 0
    %1026 = vmatpush1.bf16.xpose.msra.mxu0 0
    %1027 = vmatprep.subr.bf16.mxu0 0
    %1028 = vmatpush1.bf16.xpose.msra.mxu0 0
    %1029 = vmatprep.subr.bf16.mxu0 0
    %1030 = vmatpush1.bf16.xpose.msra.mxu0 0
    %1031 = vmatprep.subr.bf16.mxu0 0
    %1032 = vmatpush1.bf16.xpose.msra.mxu0 0
    %1033 = vmatprep.subr.bf16.mxu0 0
    %1034 = vmatpush1.bf16.xpose.msra.mxu0 0
    %1035 = vmatprep.subr.bf16.mxu0 0
    %1036 = vmatpush1.bf16.xpose.msra.mxu0 0
    %1037 = vmatprep.subr.bf16.mxu0 0
    %1038 = vmatpush1.bf16.xpose.msra.mxu0 0
    %1039 = vmatprep.subr.bf16.mxu0 0
    %1040 = vmatpush1.bf16.xpose.msra.mxu0 0
    %1041 = vmatprep.subr.bf16.mxu0 0
    %1042 = vmatpush1.bf16.xpose.msra.mxu0 0
    %1043 = vmatprep.subr.bf16.mxu0 0
    %1044 = vmatpush1.bf16.xpose.msra.mxu0 0
    %1045 = vmatprep.subr.bf16.mxu0 0
    %1046 = vmatpush1.bf16.xpose.msra.mxu0 0
    %1047 = vmatprep.mubr.bf16.mxu0 0
    %1048 = vmatmul.mubr.bf16.gmra.mrb[0].mxu0 %v1010
    %v1049 = vpop.f32.mrb[0].mxu0
    %v1050 = vadd.f32 0.0, %v1049
    %v1051 = vpop.f32.mrb[0].mxu0
    %v1052 = vpop.f32.mrb[0].mxu0
    %v1053 = vadd.f32 0.0, %v1052
    %v1054 = vpop.f32.mrb[0].mxu0
    %1055 = vdwg.mxu0
    %1056 = vrot.lane.b32.xlu0 %v361, 64
    %v1057 = vpop.permute.xlu0 %1056
    %1058 = vrot.lane.b32.xlu0 %v362, 64
    %v1059 = vpop.permute.xlu0 %1058
    %v1061 = vsel %vm397, %v1057, 0
    %v1064 = vsel %vm397, %v1059, 0
    %1066 = vmatprep.subr.bf16.mxu0 0
    %1067 = vmatpush1.bf16.xpose.msra.mxu0 %v1064
    %1068 = vmatprep.subr.bf16.mxu0 0
    %1069 = vmatpush1.bf16.xpose.msra.mxu0 0
    %1070 = vmatprep.subr.bf16.mxu0 0
    %1071 = vmatpush1.bf16.xpose.msra.mxu0 0
    %1072 = vmatprep.subr.bf16.mxu0 0
    %1073 = vmatpush1.bf16.xpose.msra.mxu0 0
    %1074 = vmatprep.subr.bf16.mxu0 0
    %1075 = vmatpush1.bf16.xpose.msra.mxu0 0
    %1076 = vmatprep.subr.bf16.mxu0 0
    %1077 = vmatpush1.bf16.xpose.msra.mxu0 0
    %1078 = vmatprep.subr.bf16.mxu0 0
    %1079 = vmatpush1.bf16.xpose.msra.mxu0 0
    %1080 = vmatprep.subr.bf16.mxu0 0
    %1081 = vmatpush1.bf16.xpose.msra.mxu0 0
    %1082 = vmatprep.subr.bf16.mxu0 0
    %1083 = vmatpush1.bf16.xpose.msra.mxu0 0
    %1084 = vmatprep.subr.bf16.mxu0 0
    %1085 = vmatpush1.bf16.xpose.msra.mxu0 0
    %1086 = vmatprep.subr.bf16.mxu0 0
    %1087 = vmatpush1.bf16.xpose.msra.mxu0 0
    %1088 = vmatprep.subr.bf16.mxu0 0
    %1089 = vmatpush1.bf16.xpose.msra.mxu0 0
    %1090 = vmatprep.subr.bf16.mxu0 0
    %1091 = vmatpush1.bf16.xpose.msra.mxu0 0
    %1092 = vmatprep.subr.bf16.mxu0 0
    %1093 = vmatpush1.bf16.xpose.msra.mxu0 0
    %1094 = vmatprep.subr.bf16.mxu0 0
    %1095 = vmatpush1.bf16.xpose.msra.mxu0 0
    %1096 = vmatprep.subr.bf16.mxu0 0
    %1097 = vmatpush1.bf16.xpose.msra.mxu0 0
    %1098 = vmatprep.mubr.bf16.mxu0 0
    %1099 = vmatmul.mubr.bf16.gmra.mrb[0].mxu0 %v1061
    %v1100 = vpop.f32.mrb[0].mxu0
    %v1101 = vadd.f32 0.0, %v1100
    %v1102 = vpop.f32.mrb[0].mxu0
    %v1103 = vpop.f32.mrb[0].mxu0
    %v1104 = vadd.f32 0.0, %v1103
    %v1105 = vpop.f32.mrb[0].mxu0
    %1106 = vdwg.mxu0
    %v1107 = vmul.f32 %v1050, 0.088388346
    %v1108 = vmul.f32 %v1053, 0.088388346
    %v1109 = vmul.f32 %v1101, 0.088388346
    %v1110 = vmul.f32 %v1104, 0.088388346
    %v1111 = vadd.f32 %v1107, %v371
    %v1112 = vadd.f32 %v1108, %v372
    %v1113 = vadd.f32 %v1109, %v371
    %v1114 = vadd.f32 %v1110, %v372
    %v1115 = vsel %vm500, %v1111, -inf
    %1116 = vmax.xlane.f32.xlu0 %v1115
    %v1117 = vpop.xlane.xlu0 %1116
    %v1118 = vsel %vm500, %v1112, -inf
    %1119 = vmax.xlane.f32.xlu0 %v1118
    %v1120 = vpop.xlane.xlu0 %1119
    %v1121 = vsel %vm500, %v1113, -inf
    %1122 = vmax.xlane.f32.xlu0 %v1121
    %v1123 = vpop.xlane.xlu0 %1122
    %v1124 = vsel %vm500, %v1114, -inf
    %1125 = vmax.xlane.f32.xlu0 %v1124
    %v1126 = vpop.xlane.xlu0 %1125
    %v1127 = vsub.f32 %v1111, %v1117
    %v1128 = vsub.f32 %v1112, %v1120
    %v1129 = vsub.f32 %v1113, %v1123
    %v1130 = vsub.f32 %v1114, %v1126
    %v1131 = vmul.f32 %v1127, 1.442695
    %v1132 = vpow.pop %v1131
    %v1133 = vmul.f32 %v1128, 1.442695
    %v1134 = vpow.pop %v1133
    %v1135 = vmul.f32 %v1129, 1.442695
    %v1136 = vpow.pop %v1135
    %v1137 = vmul.f32 %v1130, 1.442695
    %v1138 = vpow.pop %v1137
    %v1139 = vsel %vm500, %v1132, 0.0
    %1140 = vadd.xlane.f32.xlu0 %v1139
    %v1141 = vpop.xlane.xlu0 %1140
    %v1142 = vsel %vm500, %v1134, 0.0
    %1143 = vadd.xlane.f32.xlu0 %v1142
    %v1144 = vpop.xlane.xlu0 %1143
    %v1145 = vsel %vm500, %v1136, 0.0
    %1146 = vadd.xlane.f32.xlu0 %v1145
    %v1147 = vpop.xlane.xlu0 %1146
    %v1148 = vsel %vm500, %v1138, 0.0
    %1149 = vadd.xlane.f32.xlu0 %v1148
    %v1150 = vpop.xlane.xlu0 %1149
    %v1151 = vrcp.pop %v1141
    %v1152 = vrcp.pop %v1144
    %v1153 = vrcp.pop %v1147
    %v1154 = vrcp.pop %v1150
    %v1155 = vmul.f32 %v1132, %v1151
    %v1156 = vmul.f32 %v1134, %v1152
    %v1157 = vmul.f32 %v1136, %v1153
    %v1158 = vmul.f32 %v1138, %v1154
    %v1159 = vpack.c.bf16 %v1156, %v1155
    %v1160 = vpack.c.bf16 %v1158, %v1157
    %1161 = vrot.lane.b32.xlu0 %v360, 64
    %v1162 = vpop.permute.xlu0 %1161
    %v1165 = vsel %vm500, %v1159, 0
    %1167 = vmatprep.subr.bf16.mxu0 0
    %1168 = vmatpush1.bf16.msra.mxu0 %v1162
    %1169 = vmatprep.subr.bf16.mxu0 0
    %1170 = vmatpush1.bf16.msra.mxu0 0
    %1171 = vmatprep.subr.bf16.mxu0 0
    %1172 = vmatpush1.bf16.msra.mxu0 0
    %1173 = vmatprep.subr.bf16.mxu0 0
    %1174 = vmatpush1.bf16.msra.mxu0 0
    %1175 = vmatprep.subr.bf16.mxu0 0
    %1176 = vmatpush1.bf16.msra.mxu0 0
    %1177 = vmatprep.subr.bf16.mxu0 0
    %1178 = vmatpush1.bf16.msra.mxu0 0
    %1179 = vmatprep.subr.bf16.mxu0 0
    %1180 = vmatpush1.bf16.msra.mxu0 0
    %1181 = vmatprep.subr.bf16.mxu0 0
    %1182 = vmatpush1.bf16.msra.mxu0 0
    %1183 = vmatprep.subr.bf16.mxu0 0
    %1184 = vmatpush1.bf16.msra.mxu0 0
    %1185 = vmatprep.subr.bf16.mxu0 0
    %1186 = vmatpush1.bf16.msra.mxu0 0
    %1187 = vmatprep.subr.bf16.mxu0 0
    %1188 = vmatpush1.bf16.msra.mxu0 0
    %1189 = vmatprep.subr.bf16.mxu0 0
    %1190 = vmatpush1.bf16.msra.mxu0 0
    %1191 = vmatprep.subr.bf16.mxu0 0
    %1192 = vmatpush1.bf16.msra.mxu0 0
    %1193 = vmatprep.subr.bf16.mxu0 0
    %1194 = vmatpush1.bf16.msra.mxu0 0
    %1195 = vmatprep.subr.bf16.mxu0 0
    %1196 = vmatpush1.bf16.msra.mxu0 0
    %1197 = vmatprep.subr.bf16.mxu0 0
    %1198 = vmatpush1.bf16.msra.mxu0 0
    %1199 = vmatprep.mubr.bf16.mxu0 0
    %1200 = vmatmul.mubr.bf16.gmra.mrb[0].mxu0 %v1165
    %v1201 = vpop.f32.mrb[0].mxu0
    %v1202 = vadd.f32 0.0, %v1201
    %v1203 = vpop.f32.mrb[0].mxu0
    %v1204 = vpop.f32.mrb[0].mxu0
    %v1205 = vadd.f32 0.0, %v1204
    %v1206 = vpop.f32.mrb[0].mxu0
    %1207 = vdwg.mxu0
    %1208 = vrot.lane.b32.xlu0 %v363, 64
    %v1209 = vpop.permute.xlu0 %1208
    %v1212 = vsel %vm500, %v1160, 0
    %1214 = vmatprep.subr.bf16.mxu0 0
    %1215 = vmatpush1.bf16.msra.mxu0 %v1209
    %1216 = vmatprep.subr.bf16.mxu0 0
    %1217 = vmatpush1.bf16.msra.mxu0 0
    %1218 = vmatprep.subr.bf16.mxu0 0
    %1219 = vmatpush1.bf16.msra.mxu0 0
    %1220 = vmatprep.subr.bf16.mxu0 0
    %1221 = vmatpush1.bf16.msra.mxu0 0
    %1222 = vmatprep.subr.bf16.mxu0 0
    %1223 = vmatpush1.bf16.msra.mxu0 0
    %1224 = vmatprep.subr.bf16.mxu0 0
    %1225 = vmatpush1.bf16.msra.mxu0 0
    %1226 = vmatprep.subr.bf16.mxu0 0
    %1227 = vmatpush1.bf16.msra.mxu0 0
    %1228 = vmatprep.subr.bf16.mxu0 0
    %1229 = vmatpush1.bf16.msra.mxu0 0
    %1230 = vmatprep.subr.bf16.mxu0 0
    %1231 = vmatpush1.bf16.msra.mxu0 0
    %1232 = vmatprep.subr.bf16.mxu0 0
    %1233 = vmatpush1.bf16.msra.mxu0 0
    %1234 = vmatprep.subr.bf16.mxu0 0
    %1235 = vmatpush1.bf16.msra.mxu0 0
    %1236 = vmatprep.subr.bf16.mxu0 0
    %1237 = vmatpush1.bf16.msra.mxu0 0
    %1238 = vmatprep.subr.bf16.mxu0 0
    %1239 = vmatpush1.bf16.msra.mxu0 0
    %1240 = vmatprep.subr.bf16.mxu0 0
    %1241 = vmatpush1.bf16.msra.mxu0 0
    %1242 = vmatprep.subr.bf16.mxu0 0
    %1243 = vmatpush1.bf16.msra.mxu0 0
    %1244 = vmatprep.subr.bf16.mxu0 0
    %1245 = vmatpush1.bf16.msra.mxu0 0
    %1246 = vmatprep.mubr.bf16.mxu0 0
    %1247 = vmatmul.mubr.bf16.gmra.mrb[0].mxu0 %v1212
    %v1248 = vpop.f32.mrb[0].mxu0
    %v1249 = vadd.f32 0.0, %v1248
    %v1250 = vpop.f32.mrb[0].mxu0
    %v1251 = vpop.f32.mrb[0].mxu0
    %v1252 = vadd.f32 0.0, %v1251
    %v1253 = vpop.f32.mrb[0].mxu0
    %1254 = vdwg.mxu0
    %v1255 = vpack.c.bf16 %v1205, %v1202
    %v1256 = vpack.c.bf16 %v1252, %v1249
    %v1258 = vsel %vm397, %v1255, 0
    %v1261 = vsel %vm397, %v1256, 0
    %1263 = vmatprep.subr.bf16.mxu0 0
    %1264 = vmatpush1.bf16.msra.mxu0 %v393
    %1265 = vmatprep.subr.bf16.mxu0 0
    %1266 = vmatpush1.bf16.msra.mxu0 %v394
    %1267 = vmatprep.subr.bf16.mxu0 0
    %1268 = vmatpush1.bf16.msra.mxu0 0
    %1269 = vmatprep.subr.bf16.mxu0 0
    %1270 = vmatpush1.bf16.msra.mxu0 0
    %1271 = vmatprep.subr.bf16.mxu0 0
    %1272 = vmatpush1.bf16.msra.mxu0 0
    %1273 = vmatprep.subr.bf16.mxu0 0
    %1274 = vmatpush1.bf16.msra.mxu0 0
    %1275 = vmatprep.subr.bf16.mxu0 0
    %1276 = vmatpush1.bf16.msra.mxu0 0
    %1277 = vmatprep.subr.bf16.mxu0 0
    %1278 = vmatpush1.bf16.msra.mxu0 0
    %1279 = vmatprep.subr.bf16.mxu0 0
    %1280 = vmatpush1.bf16.msra.mxu0 0
    %1281 = vmatprep.subr.bf16.mxu0 0
    %1282 = vmatpush1.bf16.msra.mxu0 0
    %1283 = vmatprep.subr.bf16.mxu0 0
    %1284 = vmatpush1.bf16.msra.mxu0 0
    %1285 = vmatprep.subr.bf16.mxu0 0
    %1286 = vmatpush1.bf16.msra.mxu0 0
    %1287 = vmatprep.subr.bf16.mxu0 0
    %1288 = vmatpush1.bf16.msra.mxu0 0
    %1289 = vmatprep.subr.bf16.mxu0 0
    %1290 = vmatpush1.bf16.msra.mxu0 0
    %1291 = vmatprep.subr.bf16.mxu0 0
    %1292 = vmatpush1.bf16.msra.mxu0 0
    %1293 = vmatprep.subr.bf16.mxu0 0
    %1294 = vmatpush1.bf16.msra.mxu0 0
    %1295 = vmatprep.mubr.bf16.mxu0 0
    %1296 = vmatmul.mubr.bf16.gmra.mrb[0].mxu0 %v1258
    %v1297 = vpop.f32.mrb[0].mxu0
    %v1298 = vadd.f32 0.0, %v1297
    %v1299 = vpop.f32.mrb[0].mxu0
    %v1300 = vpop.f32.mrb[0].mxu0
    %v1301 = vadd.f32 0.0, %v1300
    %v1302 = vpop.f32.mrb[0].mxu0
    %1303 = vmatprep.mubr.bf16.mxu0 0
    %1304 = vmatmul.mubr.bf16.gmra.mrb[0].mxu0 %v1261
    %v1305 = vpop.f32.mrb[0].mxu0
    %v1306 = vadd.f32 0.0, %v1305
    %v1307 = vpop.f32.mrb[0].mxu0
    %v1308 = vpop.f32.mrb[0].mxu0
    %v1309 = vadd.f32 0.0, %v1308
    %v1310 = vpop.f32.mrb[0].mxu0
    %1311 = vdwg.mxu0
    %v1312 = vadd.f32 %v991, %v1298
    %v1313 = vadd.f32 %v994, %v1301
    %v1314 = vadd.f32 %v999, %v1306
    %v1315 = vadd.f32 %v1002, %v1309
    %1316 = vrot.lane.b32.xlu0 %v358, 32
    %v1317 = vpop.permute.xlu0 %1316
    %1318 = vrot.lane.b32.xlu0 %v359, 32
    %v1319 = vpop.permute.xlu0 %1318
    %v1321 = vsel %vm397, %v1317, 0
    %v1324 = vsel %vm397, %v1319, 0
    %1326 = vmatprep.subr.bf16.mxu0 0
    %1327 = vmatpush1.bf16.xpose.msra.mxu0 %v1324
    %1328 = vmatprep.subr.bf16.mxu0 0
    %1329 = vmatpush1.bf16.xpose.msra.mxu0 0
    %1330 = vmatprep.subr.bf16.mxu0 0
    %1331 = vmatpush1.bf16.xpose.msra.mxu0 0
    %1332 = vmatprep.subr.bf16.mxu0 0
    %1333 = vmatpush1.bf16.xpose.msra.mxu0 0
    %1334 = vmatprep.subr.bf16.mxu0 0
    %1335 = vmatpush1.bf16.xpose.msra.mxu0 0
    %1336 = vmatprep.subr.bf16.mxu0 0
    %1337 = vmatpush1.bf16.xpose.msra.mxu0 0
    %1338 = vmatprep.subr.bf16.mxu0 0
    %1339 = vmatpush1.bf16.xpose.msra.mxu0 0
    %1340 = vmatprep.subr.bf16.mxu0 0
    %1341 = vmatpush1.bf16.xpose.msra.mxu0 0
    %1342 = vmatprep.subr.bf16.mxu0 0
    %1343 = vmatpush1.bf16.xpose.msra.mxu0 0
    %1344 = vmatprep.subr.bf16.mxu0 0
    %1345 = vmatpush1.bf16.xpose.msra.mxu0 0
    %1346 = vmatprep.subr.bf16.mxu0 0
    %1347 = vmatpush1.bf16.xpose.msra.mxu0 0
    %1348 = vmatprep.subr.bf16.mxu0 0
    %1349 = vmatpush1.bf16.xpose.msra.mxu0 0
    %1350 = vmatprep.subr.bf16.mxu0 0
    %1351 = vmatpush1.bf16.xpose.msra.mxu0 0
    %1352 = vmatprep.subr.bf16.mxu0 0
    %1353 = vmatpush1.bf16.xpose.msra.mxu0 0
    %1354 = vmatprep.subr.bf16.mxu0 0
    %1355 = vmatpush1.bf16.xpose.msra.mxu0 0
    %1356 = vmatprep.subr.bf16.mxu0 0
    %1357 = vmatpush1.bf16.xpose.msra.mxu0 0
    %1358 = vmatprep.mubr.bf16.mxu0 0
    %1359 = vmatmul.mubr.bf16.gmra.mrb[0].mxu0 %v1321
    %v1360 = vpop.f32.mrb[0].mxu0
    %v1361 = vadd.f32 0.0, %v1360
    %v1362 = vpop.f32.mrb[0].mxu0
    %v1363 = vpop.f32.mrb[0].mxu0
    %v1364 = vadd.f32 0.0, %v1363
    %v1365 = vpop.f32.mrb[0].mxu0
    %1366 = vdwg.mxu0
    %1367 = vrot.lane.b32.xlu0 %v361, 32
    %v1368 = vpop.permute.xlu0 %1367
    %1369 = vrot.lane.b32.xlu0 %v362, 32
    %v1370 = vpop.permute.xlu0 %1369
    %v1372 = vsel %vm397, %v1368, 0
    %v1375 = vsel %vm397, %v1370, 0
    %1377 = vmatprep.subr.bf16.mxu0 0
    %1378 = vmatpush1.bf16.xpose.msra.mxu0 %v1375
    %1379 = vmatprep.subr.bf16.mxu0 0
    %1380 = vmatpush1.bf16.xpose.msra.mxu0 0
    %1381 = vmatprep.subr.bf16.mxu0 0
    %1382 = vmatpush1.bf16.xpose.msra.mxu0 0
    %1383 = vmatprep.subr.bf16.mxu0 0
    %1384 = vmatpush1.bf16.xpose.msra.mxu0 0
    %1385 = vmatprep.subr.bf16.mxu0 0
    %1386 = vmatpush1.bf16.xpose.msra.mxu0 0
    %1387 = vmatprep.subr.bf16.mxu0 0
    %1388 = vmatpush1.bf16.xpose.msra.mxu0 0
    %1389 = vmatprep.subr.bf16.mxu0 0
    %1390 = vmatpush1.bf16.xpose.msra.mxu0 0
    %1391 = vmatprep.subr.bf16.mxu0 0
    %1392 = vmatpush1.bf16.xpose.msra.mxu0 0
    %1393 = vmatprep.subr.bf16.mxu0 0
    %1394 = vmatpush1.bf16.xpose.msra.mxu0 0
    %1395 = vmatprep.subr.bf16.mxu0 0
    %1396 = vmatpush1.bf16.xpose.msra.mxu0 0
    %1397 = vmatprep.subr.bf16.mxu0 0
    %1398 = vmatpush1.bf16.xpose.msra.mxu0 0
    %1399 = vmatprep.subr.bf16.mxu0 0
    %1400 = vmatpush1.bf16.xpose.msra.mxu0 0
    %1401 = vmatprep.subr.bf16.mxu0 0
    %1402 = vmatpush1.bf16.xpose.msra.mxu0 0
    %1403 = vmatprep.subr.bf16.mxu0 0
    %1404 = vmatpush1.bf16.xpose.msra.mxu0 0
    %1405 = vmatprep.subr.bf16.mxu0 0
    %1406 = vmatpush1.bf16.xpose.msra.mxu0 0
    %1407 = vmatprep.subr.bf16.mxu0 0
    %1408 = vmatpush1.bf16.xpose.msra.mxu0 0
    %1409 = vmatprep.mubr.bf16.mxu0 0
    %1410 = vmatmul.mubr.bf16.gmra.mrb[0].mxu0 %v1372
    %v1411 = vpop.f32.mrb[0].mxu0
    %v1412 = vadd.f32 0.0, %v1411
    %v1413 = vpop.f32.mrb[0].mxu0
    %v1414 = vpop.f32.mrb[0].mxu0
    %v1415 = vadd.f32 0.0, %v1414
    %v1416 = vpop.f32.mrb[0].mxu0
    %1417 = vdwg.mxu0
    %v1418 = vmul.f32 %v1361, 0.088388346
    %v1419 = vmul.f32 %v1364, 0.088388346
    %v1420 = vmul.f32 %v1412, 0.088388346
    %v1421 = vmul.f32 %v1415, 0.088388346
    %v1422 = vadd.f32 %v1418, %v371
    %v1423 = vadd.f32 %v1419, %v372
    %v1424 = vadd.f32 %v1420, %v371
    %v1425 = vadd.f32 %v1421, %v372
    %v1426 = vsel %vm500, %v1422, -inf
    %1427 = vmax.xlane.f32.xlu0 %v1426
    %v1428 = vpop.xlane.xlu0 %1427
    %v1429 = vsel %vm500, %v1423, -inf
    %1430 = vmax.xlane.f32.xlu0 %v1429
    %v1431 = vpop.xlane.xlu0 %1430
    %v1432 = vsel %vm500, %v1424, -inf
    %1433 = vmax.xlane.f32.xlu0 %v1432
    %v1434 = vpop.xlane.xlu0 %1433
    %v1435 = vsel %vm500, %v1425, -inf
    %1436 = vmax.xlane.f32.xlu0 %v1435
    %v1437 = vpop.xlane.xlu0 %1436
    %v1438 = vsub.f32 %v1422, %v1428
    %v1439 = vsub.f32 %v1423, %v1431
    %v1440 = vsub.f32 %v1424, %v1434
    %v1441 = vsub.f32 %v1425, %v1437
    %v1442 = vmul.f32 %v1438, 1.442695
    %v1443 = vpow.pop %v1442
    %v1444 = vmul.f32 %v1439, 1.442695
    %v1445 = vpow.pop %v1444
    %v1446 = vmul.f32 %v1440, 1.442695
    %v1447 = vpow.pop %v1446
    %v1448 = vmul.f32 %v1441, 1.442695
    %v1449 = vpow.pop %v1448
    %v1450 = vsel %vm500, %v1443, 0.0
    %1451 = vadd.xlane.f32.xlu0 %v1450
    %v1452 = vpop.xlane.xlu0 %1451
    %v1453 = vsel %vm500, %v1445, 0.0
    %1454 = vadd.xlane.f32.xlu0 %v1453
    %v1455 = vpop.xlane.xlu0 %1454
    %v1456 = vsel %vm500, %v1447, 0.0
    %1457 = vadd.xlane.f32.xlu0 %v1456
    %v1458 = vpop.xlane.xlu0 %1457
    %v1459 = vsel %vm500, %v1449, 0.0
    %1460 = vadd.xlane.f32.xlu0 %v1459
    %v1461 = vpop.xlane.xlu0 %1460
    %v1462 = vrcp.pop %v1452
    %v1463 = vrcp.pop %v1455
    %v1464 = vrcp.pop %v1458
    %v1465 = vrcp.pop %v1461
    %v1466 = vmul.f32 %v1443, %v1462
    %v1467 = vmul.f32 %v1445, %v1463
    %v1468 = vmul.f32 %v1447, %v1464
    %v1469 = vmul.f32 %v1449, %v1465
    %v1470 = vpack.c.bf16 %v1467, %v1466
    %v1471 = vpack.c.bf16 %v1469, %v1468
    %1472 = vrot.lane.b32.xlu0 %v360, 32
    %v1473 = vpop.permute.xlu0 %1472
    %v1476 = vsel %vm500, %v1470, 0
    %1478 = vmatprep.subr.bf16.mxu0 0
    %1479 = vmatpush1.bf16.msra.mxu0 %v1473
    %1480 = vmatprep.subr.bf16.mxu0 0
    %1481 = vmatpush1.bf16.msra.mxu0 0
    %1482 = vmatprep.subr.bf16.mxu0 0
    %1483 = vmatpush1.bf16.msra.mxu0 0
    %1484 = vmatprep.subr.bf16.mxu0 0
    %1485 = vmatpush1.bf16.msra.mxu0 0
    %1486 = vmatprep.subr.bf16.mxu0 0
    %1487 = vmatpush1.bf16.msra.mxu0 0
    %1488 = vmatprep.subr.bf16.mxu0 0
    %1489 = vmatpush1.bf16.msra.mxu0 0
    %1490 = vmatprep.subr.bf16.mxu0 0
    %1491 = vmatpush1.bf16.msra.mxu0 0
    %1492 = vmatprep.subr.bf16.mxu0 0
    %1493 = vmatpush1.bf16.msra.mxu0 0
    %1494 = vmatprep.subr.bf16.mxu0 0
    %1495 = vmatpush1.bf16.msra.mxu0 0
    %1496 = vmatprep.subr.bf16.mxu0 0
    %1497 = vmatpush1.bf16.msra.mxu0 0
    %1498 = vmatprep.subr.bf16.mxu0 0
    %1499 = vmatpush1.bf16.msra.mxu0 0
    %1500 = vmatprep.subr.bf16.mxu0 0
    %1501 = vmatpush1.bf16.msra.mxu0 0
    %1502 = vmatprep.subr.bf16.mxu0 0
    %1503 = vmatpush1.bf16.msra.mxu0 0
    %1504 = vmatprep.subr.bf16.mxu0 0
    %1505 = vmatpush1.bf16.msra.mxu0 0
    %1506 = vmatprep.subr.bf16.mxu0 0
    %1507 = vmatpush1.bf16.msra.mxu0 0
    %1508 = vmatprep.subr.bf16.mxu0 0
    %1509 = vmatpush1.bf16.msra.mxu0 0
    %1510 = vmatprep.mubr.bf16.mxu0 0
    %1511 = vmatmul.mubr.bf16.gmra.mrb[0].mxu0 %v1476
    %v1512 = vpop.f32.mrb[0].mxu0
    %v1513 = vadd.f32 0.0, %v1512
    %v1514 = vpop.f32.mrb[0].mxu0
    %v1515 = vpop.f32.mrb[0].mxu0
    %v1516 = vadd.f32 0.0, %v1515
    %v1517 = vpop.f32.mrb[0].mxu0
    %1518 = vdwg.mxu0
    %1519 = vrot.lane.b32.xlu0 %v363, 32
    %v1520 = vpop.permute.xlu0 %1519
    %v1523 = vsel %vm500, %v1471, 0
    %1525 = vmatprep.subr.bf16.mxu0 0
    %1526 = vmatpush1.bf16.msra.mxu0 %v1520
    %1527 = vmatprep.subr.bf16.mxu0 0
    %1528 = vmatpush1.bf16.msra.mxu0 0
    %1529 = vmatprep.subr.bf16.mxu0 0
    %1530 = vmatpush1.bf16.msra.mxu0 0
    %1531 = vmatprep.subr.bf16.mxu0 0
    %1532 = vmatpush1.bf16.msra.mxu0 0
    %1533 = vmatprep.subr.bf16.mxu0 0
    %1534 = vmatpush1.bf16.msra.mxu0 0
    %1535 = vmatprep.subr.bf16.mxu0 0
    %1536 = vmatpush1.bf16.msra.mxu0 0
    %1537 = vmatprep.subr.bf16.mxu0 0
    %1538 = vmatpush1.bf16.msra.mxu0 0
    %1539 = vmatprep.subr.bf16.mxu0 0
    %1540 = vmatpush1.bf16.msra.mxu0 0
    %1541 = vmatprep.subr.bf16.mxu0 0
    %1542 = vmatpush1.bf16.msra.mxu0 0
    %1543 = vmatprep.subr.bf16.mxu0 0
    %1544 = vmatpush1.bf16.msra.mxu0 0
    %1545 = vmatprep.subr.bf16.mxu0 0
    %1546 = vmatpush1.bf16.msra.mxu0 0
    %1547 = vmatprep.subr.bf16.mxu0 0
    %1548 = vmatpush1.bf16.msra.mxu0 0
    %1549 = vmatprep.subr.bf16.mxu0 0
    %1550 = vmatpush1.bf16.msra.mxu0 0
    %1551 = vmatprep.subr.bf16.mxu0 0
    %1552 = vmatpush1.bf16.msra.mxu0 0
    %1553 = vmatprep.subr.bf16.mxu0 0
    %1554 = vmatpush1.bf16.msra.mxu0 0
    %1555 = vmatprep.subr.bf16.mxu0 0
    %1556 = vmatpush1.bf16.msra.mxu0 0
    %1557 = vmatprep.mubr.bf16.mxu0 0
    %1558 = vmatmul.mubr.bf16.gmra.mrb[0].mxu0 %v1523
    %v1559 = vpop.f32.mrb[0].mxu0
    %v1560 = vadd.f32 0.0, %v1559
    %v1561 = vpop.f32.mrb[0].mxu0
    %v1562 = vpop.f32.mrb[0].mxu0
    %v1563 = vadd.f32 0.0, %v1562
    %v1564 = vpop.f32.mrb[0].mxu0
    %1565 = vdwg.mxu0
    %v1566 = vpack.c.bf16 %v1516, %v1513
    %v1567 = vpack.c.bf16 %v1563, %v1560
    %v1569 = vsel %vm397, %v1566, 0
    %v1572 = vsel %vm397, %v1567, 0
    %1574 = vmatprep.subr.bf16.mxu0 0
    %1575 = vmatpush1.bf16.msra.mxu0 %v395
    %1576 = vmatprep.subr.bf16.mxu0 0
    %1577 = vmatpush1.bf16.msra.mxu0 %v396
    %1578 = vmatprep.subr.bf16.mxu0 0
    %1579 = vmatpush1.bf16.msra.mxu0 0
    %1580 = vmatprep.subr.bf16.mxu0 0
    %1581 = vmatpush1.bf16.msra.mxu0 0
    %1582 = vmatprep.subr.bf16.mxu0 0
    %1583 = vmatpush1.bf16.msra.mxu0 0
    %1584 = vmatprep.subr.bf16.mxu0 0
    %1585 = vmatpush1.bf16.msra.mxu0 0
    %1586 = vmatprep.subr.bf16.mxu0 0
    %1587 = vmatpush1.bf16.msra.mxu0 0
    %1588 = vmatprep.subr.bf16.mxu0 0
    %1589 = vmatpush1.bf16.msra.mxu0 0
    %1590 = vmatprep.subr.bf16.mxu0 0
    %1591 = vmatpush1.bf16.msra.mxu0 0
    %1592 = vmatprep.subr.bf16.mxu0 0
    %1593 = vmatpush1.bf16.msra.mxu0 0
    %1594 = vmatprep.subr.bf16.mxu0 0
    %1595 = vmatpush1.bf16.msra.mxu0 0
    %1596 = vmatprep.subr.bf16.mxu0 0
    %1597 = vmatpush1.bf16.msra.mxu0 0
    %1598 = vmatprep.subr.bf16.mxu0 0
    %1599 = vmatpush1.bf16.msra.mxu0 0
    %1600 = vmatprep.subr.bf16.mxu0 0
    %1601 = vmatpush1.bf16.msra.mxu0 0
    %1602 = vmatprep.subr.bf16.mxu0 0
    %1603 = vmatpush1.bf16.msra.mxu0 0
    %1604 = vmatprep.subr.bf16.mxu0 0
    %1605 = vmatpush1.bf16.msra.mxu0 0
    %1606 = vmatprep.mubr.bf16.mxu0 0
    %1607 = vmatmul.mubr.bf16.gmra.mrb[0].mxu0 %v1569
    %v1608 = vpop.f32.mrb[0].mxu0
    %v1609 = vadd.f32 0.0, %v1608
    %v1610 = vpop.f32.mrb[0].mxu0
    %v1611 = vpop.f32.mrb[0].mxu0
    %v1612 = vadd.f32 0.0, %v1611
    %v1613 = vpop.f32.mrb[0].mxu0
    %1614 = vmatprep.mubr.bf16.mxu0 0
    %1615 = vmatmul.mubr.bf16.gmra.mrb[0].mxu0 %v1572
    %v1616 = vpop.f32.mrb[0].mxu0
    %v1617 = vadd.f32 0.0, %v1616
    %v1618 = vpop.f32.mrb[0].mxu0
    %v1619 = vpop.f32.mrb[0].mxu0
    %v1620 = vadd.f32 0.0, %v1619
    %v1621 = vpop.f32.mrb[0].mxu0
    %1622 = vdwg.mxu0
    %v1623 = vadd.f32 %v1312, %v1609
    %v1624 = vadd.f32 %v1313, %v1612
    %v1625 = vadd.f32 %v1314, %v1617
    %v1626 = vadd.f32 %v1315, %v1620
    %v1627 = vld [vmem:[%s5] sm:$0x1]
    %v1629 = vlaneseq
    %v1630 = vshrl.u32 %v1629, 7
    %v1631 = vsub.s32 0, %v1630
    %v1632 = vrot.slane %v1627, %v1631
    %v1634 = vadd.f32 %v1623, %v1632
    %v1635 = vadd.f32 %v1624, %v1632
    %v1636 = vadd.f32 %v1625, %v1632
    %v1637 = vadd.f32 %v1626, %v1632
    %v1638 = vadd.f32 %v111, %v1634
    %v1639 = vadd.f32 %v112, %v1635
    %v1640 = vadd.f32 %v113, %v1636
    %v1641 = vadd.f32 %v114, %v1637
    %1642 = vadd.xlane.f32.xlu0 %v1638
    %v1643 = vpop.xlane.xlu0 %1642
    %1644 = vadd.xlane.f32.xlu0 %v1639
    %v1645 = vpop.xlane.xlu0 %1644
    %1646 = vadd.xlane.f32.xlu0 %v1640
    %v1647 = vpop.xlane.xlu0 %1646
    %1648 = vadd.xlane.f32.xlu0 %v1641
    %v1649 = vpop.xlane.xlu0 %1648
    %v1650 = vmul.f32 %v1643, %v123
    %v1651 = vmul.f32 %v1645, %v123
    %v1652 = vmul.f32 %v1647, %v123
    %v1653 = vmul.f32 %v1649, %v123
    %v1654 = vsub.f32 %v1638, %v1650
    %v1655 = vsub.f32 %v1639, %v1651
    %v1656 = vsub.f32 %v1640, %v1652
    %v1657 = vsub.f32 %v1641, %v1653
    %v1658 = vmul.f32 %v1654, %v1654
    %v1659 = vmul.f32 %v1655, %v1655
    %v1660 = vmul.f32 %v1656, %v1656
    %v1661 = vmul.f32 %v1657, %v1657
    %1662 = vadd.xlane.f32.xlu0 %v1658
    %v1663 = vpop.xlane.xlu0 %1662
    %1664 = vadd.xlane.f32.xlu0 %v1659
    %v1665 = vpop.xlane.xlu0 %1664
    %1666 = vadd.xlane.f32.xlu0 %v1660
    %v1667 = vpop.xlane.xlu0 %1666
    %1668 = vadd.xlane.f32.xlu0 %v1661
    %v1669 = vpop.xlane.xlu0 %1668
    %v1670 = vmul.f32 %v1663, %v123
    %v1671 = vmul.f32 %v1665, %v123
    %v1672 = vmul.f32 %v1667, %v123
    %v1673 = vmul.f32 %v1669, %v123
    %v1674 = vadd.f32 %v1670, 1e-06
    %v1675 = vadd.f32 %v1671, 1e-06
    %v1676 = vadd.f32 %v1672, 1e-06
    %v1677 = vadd.f32 %v1673, 1e-06
    %v1678 = vrsqrt.pop %v1674
    %v1679 = vrsqrt.pop %v1675
    %v1680 = vrsqrt.pop %v1676
    %v1681 = vrsqrt.pop %v1677
    %v1682 = vmul.f32 %v1654, %v1678
    %v1683 = vmul.f32 %v1655, %v1679
    %v1684 = vmul.f32 %v1656, %v1680
    %v1685 = vmul.f32 %v1657, %v1681
    %v1686 = vld [vmem:[%s6] sm:$0x1]
    %v1688 = vlaneseq
    %v1689 = vshrl.u32 %v1688, 7
    %v1690 = vsub.s32 0, %v1689
    %v1691 = vrot.slane %v1686, %v1690
    %v1693 = vmul.f32 %v1682, %v1691
    %v1694 = vmul.f32 %v1683, %v1691
    %v1695 = vmul.f32 %v1684, %v1691
    %v1696 = vmul.f32 %v1685, %v1691
    %v1697 = vld [vmem:[%s7] sm:$0x1]
    %v1699 = vlaneseq
    %v1700 = vshrl.u32 %v1699, 7
    %v1701 = vsub.s32 0, %v1700
    %v1702 = vrot.slane %v1697, %v1701
    %v1704 = vadd.f32 %v1693, %v1702
    %v1705 = vadd.f32 %v1694, %v1702
    %v1706 = vadd.f32 %v1695, %v1702
    %v1707 = vadd.f32 %v1696, %v1702
    %v1708 = vpack.c.bf16 %v1705, %v1704
    %v1709 = vpack.c.bf16 %v1707, %v1706
    %v1710 = vld [vmem:[#allocation8] sm:$0xff]
    %v1711 = vld [vmem:[#allocation8 + $0x8] sm:$0xff]
    %v1712 = vld [vmem:[#allocation8 + $0x10] sm:$0xff]
    %v1713 = vld [vmem:[#allocation8 + $0x18] sm:$0xff]
    %v1714 = vld [vmem:[#allocation8 + $0x20] sm:$0xff]
    %v1715 = vld [vmem:[#allocation8 + $0x28] sm:$0xff]
    %v1716 = vld [vmem:[#allocation8 + $0x30] sm:$0xff]
    %v1717 = vld [vmem:[#allocation8 + $0x38] sm:$0xff]
    %v1718 = vld [vmem:[#allocation8 + $0x40] sm:$0xff]
    %v1719 = vld [vmem:[#allocation8 + $0x48] sm:$0xff]
    %v1720 = vld [vmem:[#allocation8 + $0x50] sm:$0xff]
    %v1721 = vld [vmem:[#allocation8 + $0x58] sm:$0xff]
    %v1722 = vld [vmem:[#allocation8 + $0x60] sm:$0xff]
    %v1723 = vld [vmem:[#allocation8 + $0x68] sm:$0xff]
    %v1724 = vld [vmem:[#allocation8 + $0x70] sm:$0xff]
    %v1725 = vld [vmem:[#allocation8 + $0x78] sm:$0xff]
    %v1726 = vpack.c.bf16 %v1711, %v1710
    %v1727 = vpack.c.bf16 %v1713, %v1712
    %v1728 = vpack.c.bf16 %v1715, %v1714
    %v1729 = vpack.c.bf16 %v1717, %v1716
    %v1730 = vpack.c.bf16 %v1719, %v1718
    %v1731 = vpack.c.bf16 %v1721, %v1720
    %v1732 = vpack.c.bf16 %v1723, %v1722
    %v1733 = vpack.c.bf16 %v1725, %v1724
    %v1734 = vld [vmem:[%s9] sm:$0x1]
    %v1736 = vlaneseq
    %v1737 = vshrl.u32 %v1736, 7
    %v1738 = vsub.s32 0, %v1737
    %v1739 = vrot.slane %v1734, %v1738
    %1741 = vmatprep.subr.bf16.mxu0 0
    %1742 = vmatpush1.bf16.msra.mxu0 %v1726
    %1743 = vmatprep.subr.bf16.mxu0 0
    %1744 = vmatpush1.bf16.msra.mxu0 %v1727
    %1745 = vmatprep.subr.bf16.mxu0 0
    %1746 = vmatpush1.bf16.msra.mxu0 %v1728
    %1747 = vmatprep.subr.bf16.mxu0 0
    %1748 = vmatpush1.bf16.msra.mxu0 %v1729
    %1749 = vmatprep.subr.bf16.mxu0 0
    %1750 = vmatpush1.bf16.msra.mxu0 %v1730
    %1751 = vmatprep.subr.bf16.mxu0 0
    %1752 = vmatpush1.bf16.msra.mxu0 %v1731
    %1753 = vmatprep.subr.bf16.mxu0 0
    %1754 = vmatpush1.bf16.msra.mxu0 %v1732
    %1755 = vmatprep.subr.bf16.mxu0 0
    %1756 = vmatpush1.bf16.msra.mxu0 %v1733
    %1757 = vmatprep.subr.bf16.mxu0 0
    %1758 = vmatpush1.bf16.msra.mxu0 0
    %1759 = vmatprep.subr.bf16.mxu0 0
    %1760 = vmatpush1.bf16.msra.mxu0 0
    %1761 = vmatprep.subr.bf16.mxu0 0
    %1762 = vmatpush1.bf16.msra.mxu0 0
    %1763 = vmatprep.subr.bf16.mxu0 0
    %1764 = vmatpush1.bf16.msra.mxu0 0
    %1765 = vmatprep.subr.bf16.mxu0 0
    %1766 = vmatpush1.bf16.msra.mxu0 0
    %1767 = vmatprep.subr.bf16.mxu0 0
    %1768 = vmatpush1.bf16.msra.mxu0 0
    %1769 = vmatprep.subr.bf16.mxu0 0
    %1770 = vmatpush1.bf16.msra.mxu0 0
    %1771 = vmatprep.subr.bf16.mxu0 0
    %1772 = vmatpush1.bf16.msra.mxu0 0
    %1773 = vmatprep.mubr.bf16.mxu0 0
    %1774 = vmatmul.mubr.bf16.gmra.mrb[0].mxu0 %v1708
    %v1775 = vpop.f32.mrb[0].mxu0
    %v1776 = vadd.f32 %v1739, %v1775
    %v1777 = vpop.f32.mrb[0].mxu0
    %v1778 = vpop.f32.mrb[0].mxu0
    %v1779 = vadd.f32 %v1739, %v1778
    %v1780 = vpop.f32.mrb[0].mxu0
    %1781 = vmatprep.mubr.bf16.mxu0 0
    %1782 = vmatmul.mubr.bf16.gmra.mrb[0].mxu0 %v1709
    %v1783 = vpop.f32.mrb[0].mxu0
    %v1784 = vadd.f32 %v1739, %v1783
    %v1785 = vpop.f32.mrb[0].mxu0
    %v1786 = vpop.f32.mrb[0].mxu0
    %v1787 = vadd.f32 %v1739, %v1786
    %v1788 = vpop.f32.mrb[0].mxu0
    %1789 = vdwg.mxu0
    %v1790 = vmax.f32 %v1776, 0.0
    %v1791 = vmax.f32 %v1779, 0.0
    %v1792 = vmax.f32 %v1784, 0.0
    %v1793 = vmax.f32 %v1787, 0.0
    %v1794 = vpack.c.bf16 %v1791, %v1790
    %v1795 = vpack.c.bf16 %v1793, %v1792
    %v1796 = vld [vmem:[#allocation10] sm:$0xff]
    %v1797 = vld [vmem:[#allocation10 + $0x8] sm:$0xff]
    %v1798 = vld [vmem:[#allocation10 + $0x10] sm:$0xff]
    %v1799 = vld [vmem:[#allocation10 + $0x18] sm:$0xff]
    %v1800 = vld [vmem:[#allocation10 + $0x20] sm:$0xff]
    %v1801 = vld [vmem:[#allocation10 + $0x28] sm:$0xff]
    %v1802 = vld [vmem:[#allocation10 + $0x30] sm:$0xff]
    %v1803 = vld [vmem:[#allocation10 + $0x38] sm:$0xff]
    %v1804 = vld [vmem:[#allocation10 + $0x40] sm:$0xff]
    %v1805 = vld [vmem:[#allocation10 + $0x48] sm:$0xff]
    %v1806 = vld [vmem:[#allocation10 + $0x50] sm:$0xff]
    %v1807 = vld [vmem:[#allocation10 + $0x58] sm:$0xff]
    %v1808 = vld [vmem:[#allocation10 + $0x60] sm:$0xff]
    %v1809 = vld [vmem:[#allocation10 + $0x68] sm:$0xff]
    %v1810 = vld [vmem:[#allocation10 + $0x70] sm:$0xff]
    %v1811 = vld [vmem:[#allocation10 + $0x78] sm:$0xff]
    %v1812 = vpack.c.bf16 %v1797, %v1796
    %v1813 = vpack.c.bf16 %v1799, %v1798
    %v1814 = vpack.c.bf16 %v1801, %v1800
    %v1815 = vpack.c.bf16 %v1803, %v1802
    %v1816 = vpack.c.bf16 %v1805, %v1804
    %v1817 = vpack.c.bf16 %v1807, %v1806
    %v1818 = vpack.c.bf16 %v1809, %v1808
    %v1819 = vpack.c.bf16 %v1811, %v1810
    %v1820 = vld [vmem:[%s11] sm:$0x1]
    %v1822 = vlaneseq
    %v1823 = vshrl.u32 %v1822, 7
    %v1824 = vsub.s32 0, %v1823
    %v1825 = vrot.slane %v1820, %v1824
    %1827 = vmatprep.subr.bf16.mxu0 0
    %1828 = vmatpush1.bf16.msra.mxu0 %v1812
    %1829 = vmatprep.subr.bf16.mxu0 0
    %1830 = vmatpush1.bf16.msra.mxu0 %v1813
    %1831 = vmatprep.subr.bf16.mxu0 0
    %1832 = vmatpush1.bf16.msra.mxu0 %v1814
    %1833 = vmatprep.subr.bf16.mxu0 0
    %1834 = vmatpush1.bf16.msra.mxu0 %v1815
    %1835 = vmatprep.subr.bf16.mxu0 0
    %1836 = vmatpush1.bf16.msra.mxu0 %v1816
    %1837 = vmatprep.subr.bf16.mxu0 0
    %1838 = vmatpush1.bf16.msra.mxu0 %v1817
    %1839 = vmatprep.subr.bf16.mxu0 0
    %1840 = vmatpush1.bf16.msra.mxu0 %v1818
    %1841 = vmatprep.subr.bf16.mxu0 0
    %1842 = vmatpush1.bf16.msra.mxu0 %v1819
    %1843 = vmatprep.subr.bf16.mxu0 0
    %1844 = vmatpush1.bf16.msra.mxu0 0
    %1845 = vmatprep.subr.bf16.mxu0 0
    %1846 = vmatpush1.bf16.msra.mxu0 0
    %1847 = vmatprep.subr.bf16.mxu0 0
    %1848 = vmatpush1.bf16.msra.mxu0 0
    %1849 = vmatprep.subr.bf16.mxu0 0
    %1850 = vmatpush1.bf16.msra.mxu0 0
    %1851 = vmatprep.subr.bf16.mxu0 0
    %1852 = vmatpush1.bf16.msra.mxu0 0
    %1853 = vmatprep.subr.bf16.mxu0 0
    %1854 = vmatpush1.bf16.msra.mxu0 0
    %1855 = vmatprep.subr.bf16.mxu0 0
    %1856 = vmatpush1.bf16.msra.mxu0 0
    %1857 = vmatprep.subr.bf16.mxu0 0
    %1858 = vmatpush1.bf16.msra.mxu0 0
    %1859 = vmatprep.mubr.bf16.mxu0 0
    %1860 = vmatmul.mubr.bf16.gmra.mrb[0].mxu0 %v1794
    %v1861 = vpop.f32.mrb[0].mxu0
    %v1862 = vadd.f32 %v1825, %v1861
    %v1863 = vpop.f32.mrb[0].mxu0
    %v1864 = vpop.f32.mrb[0].mxu0
    %v1865 = vadd.f32 %v1825, %v1864
    %v1866 = vpop.f32.mrb[0].mxu0
    %1867 = vmatprep.mubr.bf16.mxu0 0
    %1868 = vmatmul.mubr.bf16.gmra.mrb[0].mxu0 %v1795
    %v1869 = vpop.f32.mrb[0].mxu0
    %v1870 = vadd.f32 %v1825, %v1869
    %v1871 = vpop.f32.mrb[0].mxu0
    %v1872 = vpop.f32.mrb[0].mxu0
    %v1873 = vadd.f32 %v1825, %v1872
    %v1874 = vpop.f32.mrb[0].mxu0
    %1875 = vdwg.mxu0
    %v1876 = vadd.f32 %v1638, %v1862
    %v1877 = vadd.f32 %v1639, %v1865
    %v1878 = vadd.f32 %v1640, %v1870
    %v1879 = vadd.f32 %v1641, %v1873
    %1880 = vst [vmem:[#allocation11] sm:$0xff] %v1876
    %1881 = vst [vmem:[#allocation11 + $0x8] sm:$0xff] %v1877
    %1882 = vst [vmem:[#allocation11 + $0x10] sm:$0xff] %v1878
    %1883 = vst [vmem:[#allocation11 + $0x18] sm:$0xff] %v1879
    // Predicated region
    $region70: #{tpu_custom_call.1} parent=1 // pred_check
      _
    $region71: #{tpu_custom_call.1} parent=1 // pred_check_branch
      %1885 = sbr.rel (0) target = $region73
    $region72: #{tpu_custom_call.1} parent=1 // pred_region
      %s1887 = ssub.s32 512, 512
      %1888 = vsyncadd [#allocation4], %s1887
      %s1889 = sshll.u32 [#allocation11], 4
      %s1890 = int_to_ptr.vmem [resolvable:$true] %s1889
      %1895 = dma.vmem_to_hbm [thread:$0]  %s1890, 512, %s12, [#allocation4], 128, 128, 8
    $region73: #{tpu_custom_call.1} parent=1 // pred_fallthru
      _
    // Predicated region
    $region74: #{tpu_custom_call.1} parent=1 // pred_check
      _
    $region75: #{tpu_custom_call.1} parent=1 // pred_check_branch
      %1897 = sbr.rel (0) target = $region77
    $region76: #{tpu_custom_call.1} parent=1 // pred_region
      %1898 = dma.done [#allocation4], 512
    $region77: #{tpu_custom_call.1} parent=1 // pred_fallthru
      _
    %1899 = vsyncpa [#allocation3], 1
    %1900 = vsyncpa [#allocation6], 1
    %1901 = vsyncpa [#allocation9], 1
    %1902 = vsyncpa [#allocation4], 1

</llo_original>
